<compile_context>
chip_gen: v5e
topology: v5e:2x2
jax: 0.10.0
libtpu: 0.0.40
codegen_flags: <defaults>
</compile_context>

<pallas_src>
import math

import jax
import jax.numpy as jnp
from jax.experimental import pallas as pl
from jax.experimental.pallas import tpu as pltpu

# ---- small synthetic GPT-2 style config ------------------------------------
VOCAB = 128      # synthetic vocab (real gpt2: 50257)
B = 2            # batch
S = 8            # sequence length
N = B * S        # collapsed token axis
E = 64           # n_embd (real gpt2: 768)
H = 4            # n_head (real gpt2: 12)
HD = E // H      # head dim
FF = 4 * E       # MLP hidden
EPS = 1e-5
NEG = -1e9
OUT_PAD = 128    # lane-dense padded width of the value-head output


def _layer_norm(x, g, b):
    mu = jnp.mean(x, axis=-1, keepdims=True)
    var = jnp.mean((x - mu) ** 2, axis=-1, keepdims=True)
    return (x - mu) * jax.lax.rsqrt(var + EPS) * g + b


def _gelu_new(x):
    c = math.sqrt(2.0 / math.pi)
    return 0.5 * x * (1.0 + jnp.tanh(c * (x + 0.044715 * x * x * x)))


def vnet_kernel(x_ref, bias_ref, pool_ref,
                g1_ref, b1_ref, wqkv_ref, bqkv_ref, wpr_ref, bpr_ref,
                g2_ref, b2_ref, wfc_ref, bfc_ref, wfp_ref, bfp_ref,
                gf_ref, bf_ref, wh_ref, bh_ref,
                out_ref):
    x = x_ref[...]          # (N, E)  all batch rows, f32
    bias = bias_ref[...]    # (N, N)  additive: causal + pad + cross-batch

    # ---------------- attention block ----------------
    h1 = _layer_norm(x, g1_ref[...], b1_ref[...])
    qkv = jnp.dot(h1, wqkv_ref[...], preferred_element_type=jnp.float32) + bqkv_ref[...]

    inv_sqrt_hd = 1.0 / math.sqrt(HD)
    attn = jnp.zeros((N, E), jnp.float32)
    for h in range(H):                                   # H=4, static unroll
        qh = qkv[:, h * HD:(h + 1) * HD]                 # (N, HD)
        kh = qkv[:, E + h * HD:E + (h + 1) * HD]         # (N, HD)
        vh = qkv[:, 2 * E + h * HD:2 * E + (h + 1) * HD] # (N, HD)
        sc = jax.lax.dot_general(qh, kh, (((1,), (1,)), ((), ())),
                                 preferred_element_type=jnp.float32) * inv_sqrt_hd
        sc = sc + bias                                   # single pre-folded mask add
        sc = sc - jnp.max(sc, axis=-1, keepdims=True)
        p = jnp.exp(sc)
        p = p * pl.reciprocal(jnp.sum(p, axis=-1, keepdims=True), approx=True)
        ctx_h = jnp.dot(p, vh, preferred_element_type=jnp.float32)      # (N, HD)
        # fuse output projection: accumulate ctx_h @ wpr[h-block]  (no concat)
        attn = attn + jnp.dot(ctx_h, wpr_ref[h * HD:(h + 1) * HD, :],
                              preferred_element_type=jnp.float32)
    x = x + attn + bpr_ref[...]

    # ---------------- MLP block ----------------
    h2 = _layer_norm(x, g2_ref[...], b2_ref[...])
    ff = jnp.dot(h2, wfc_ref[...], preferred_element_type=jnp.float32) + bfc_ref[...]
    ff = _gelu_new(ff)
    x = x + jnp.dot(ff, wfp_ref[...], preferred_element_type=jnp.float32) + bfp_ref[...]

    # ------------- final LN, per-batch sum over seq, value head -------------
    hf = _layer_norm(x, gf_ref[...], bf_ref[...])
    pooled = jnp.dot(pool_ref[...], hf, preferred_element_type=jnp.float32)   # (B, E)
    out_ref[...] = (jnp.dot(pooled, wh_ref[...], preferred_element_type=jnp.float32)
                    + bh_ref[...])                                            # (B, 128)


def vnetwork_forward(params, input_ids, attention_mask):
    # --- JAX glue: embedding lookup + collapsed-batch mask / pooling setup ---
    pos = jnp.arange(S, dtype=jnp.int32)
    x_emb = (params["wte"][input_ids] + params["wpe"][pos][None, :, :])  # (B,S,E)
    x_emb = x_emb.reshape(N, E).astype(jnp.float32)

    # combined additive attention bias on the collapsed token axis:
    # forbid cross-batch attention, non-causal keys, and padded keys.
    tok = jnp.arange(N, dtype=jnp.int32)
    bq, bk = tok[:, None] // S, tok[None, :] // S
    sq, sk = tok[:, None] % S, tok[None, :] % S
    key_ok = attention_mask.reshape(N).astype(jnp.float32)[None, :] > 0.5
    allowed = (bq == bk) & (sk <= sq) & key_ok
    bias = jnp.where(allowed, 0.0, NEG).astype(jnp.float32)          # (N, N)

    # per-batch sum-pool matrix: pooled = pool @ hf
    pool = (jnp.arange(B, dtype=jnp.int32)[:, None] == (tok // S)[None, :]
            ).astype(jnp.float32)                                     # (B, N)

    # lane-dense value head: zero-pad (E,1)/(1,1) to 128 lanes.
    wh_pad = jnp.zeros((E, OUT_PAD), jnp.float32).at[:, :1].set(params["wh"])
    bh_pad = jnp.zeros((1, OUT_PAD), jnp.float32).at[:, :1].set(params["bh"])

    weight_names = ["g1", "b1", "wqkv", "bqkv", "wpr", "bpr",
                    "g2", "b2", "wfc", "bfc", "wfp", "bfp", "gf", "bf"]
    weights = [params[n] for n in weight_names] + [wh_pad, bh_pad]

    ins = [x_emb, bias, pool] + weights

    def full_spec(a):
        nd = a.ndim
        return pl.BlockSpec(a.shape, lambda i: (0,) * nd)

    out = pl.pallas_call(
        vnet_kernel,
        out_shape=jax.ShapeDtypeStruct((B, OUT_PAD), jnp.float32),
        grid=(1,),                                  # whole problem: one grid step
        in_specs=[full_spec(a) for a in ins],
        out_specs=pl.BlockSpec((B, OUT_PAD), lambda i: (0, 0)),
        compiler_params=pltpu.CompilerParams(dimension_semantics=("arbitrary",)),
    )(*ins)
    return out[:, :1]                               # (B, 1)


# ------------------------- pure-JAX reference -------------------------------
def reference_forward(params, input_ids, attention_mask):
    pos = jnp.arange(S, dtype=jnp.int32)
    x = params["wte"][input_ids] + params["wpe"][pos][None, :, :]       # (B,S,E)
    mask_bias = (1.0 - attention_mask.astype(jnp.float32)) * NEG        # (B,S)

    h1 = _layer_norm(x, params["g1"], params["b1"])
    qkv = h1 @ params["wqkv"] + params["bqkv"]
    q = qkv[..., 0:E].reshape(B, S, H, HD)
    k = qkv[..., E:2 * E].reshape(B, S, H, HD)
    v = qkv[..., 2 * E:3 * E].reshape(B, S, H, HD)
    sc = jnp.einsum("bqhd,bkhd->bhqk", q, k) / math.sqrt(HD)
    causal = jnp.tril(jnp.ones((S, S), dtype=bool))
    sc = jnp.where(causal[None, None], sc, NEG) + mask_bias[:, None, None, :]
    sc = sc - jnp.max(sc, axis=-1, keepdims=True)
    p = jnp.exp(sc)
    p = p / jnp.sum(p, axis=-1, keepdims=True)
    ctx = jnp.einsum("bhqk,bkhd->bqhd", p, v).reshape(B, S, E)
    x = x + ctx @ params["wpr"] + params["bpr"]

    h2 = _layer_norm(x, params["g2"], params["b2"])
    ff = _gelu_new(h2 @ params["wfc"] + params["bfc"])
    x = x + ff @ params["wfp"] + params["bfp"]

    hf = _layer_norm(x, params["gf"], params["bf"])
    pooled = hf.sum(axis=1)                                            # (B, E)
    return pooled @ params["wh"] + params["bh"]                        # (B, 1)


def init_params(key):
    ks = jax.random.split(key, 10)
    n = lambda k, shp: (0.02 * jax.random.normal(k, shp)).astype(jnp.float32)
    return {
        "wte": n(ks[0], (VOCAB, E)),
        "wpe": n(ks[1], (S, E)),
        "g1": jnp.ones((1, E), jnp.float32), "b1": jnp.zeros((1, E), jnp.float32),
        "wqkv": n(ks[2], (E, 3 * E)), "bqkv": jnp.zeros((1, 3 * E), jnp.float32),
        "wpr": n(ks[3], (E, E)), "bpr": jnp.zeros((1, E), jnp.float32),
        "g2": jnp.ones((1, E), jnp.float32), "b2": jnp.zeros((1, E), jnp.float32),
        "wfc": n(ks[4], (E, FF)), "bfc": jnp.zeros((1, FF), jnp.float32),
        "wfp": n(ks[5], (FF, E)), "bfp": jnp.zeros((1, E), jnp.float32),
        "gf": jnp.ones((1, E), jnp.float32), "bf": jnp.zeros((1, E), jnp.float32),
        "wh": n(ks[6], (E, 1)), "bh": jnp.zeros((1, 1), jnp.float32),
    }


if __name__ == "__main__":
    key = jax.random.PRNGKey(0)
    kp, ki = jax.random.split(key)
    params = init_params(kp)

    # msg = {"input_ids": ..., "attention_mask": ...}
    input_ids = jax.random.randint(ki, (B, S), 0, VOCAB, dtype=jnp.int32)
    attention_mask = jnp.ones((B, S), jnp.float32).at[1, -2:].set(0.0)

    out = vnetwork_forward(params, input_ids, attention_mask)
    out = jax.block_until_ready(out)

    ref = reference_forward(params, input_ids, attention_mask)
    assert out.shape == (B, 1)
    # tolerance accounts for the EUP approx reciprocal in the softmax denominator
    assert jnp.allclose(out, ref, atol=1e-3, rtol=1e-3), (out, ref)
    print("KERNEL_OK")
</pallas_src>

<mosaic_0001>
module attributes {stable_mosaic.version = 11 : i64} {
  func.func @vnet_kernel(%arg0: i32, %arg1: memref<16x64xf32, #tpu.memory_space<vmem>>, %arg2: memref<16x16xf32, #tpu.memory_space<vmem>>, %arg3: memref<2x16xf32, #tpu.memory_space<vmem>>, %arg4: memref<1x64xf32, #tpu.memory_space<vmem>>, %arg5: memref<1x64xf32, #tpu.memory_space<vmem>>, %arg6: memref<64x192xf32, #tpu.memory_space<vmem>>, %arg7: memref<1x192xf32, #tpu.memory_space<vmem>>, %arg8: memref<64x64xf32, #tpu.memory_space<vmem>>, %arg9: memref<1x64xf32, #tpu.memory_space<vmem>>, %arg10: memref<1x64xf32, #tpu.memory_space<vmem>>, %arg11: memref<1x64xf32, #tpu.memory_space<vmem>>, %arg12: memref<64x256xf32, #tpu.memory_space<vmem>>, %arg13: memref<1x256xf32, #tpu.memory_space<vmem>>, %arg14: memref<256x64xf32, #tpu.memory_space<vmem>>, %arg15: memref<1x64xf32, #tpu.memory_space<vmem>>, %arg16: memref<1x64xf32, #tpu.memory_space<vmem>>, %arg17: memref<1x64xf32, #tpu.memory_space<vmem>>, %arg18: memref<64x128xf32, #tpu.memory_space<vmem>>, %arg19: memref<1x128xf32, #tpu.memory_space<vmem>>, %arg20: memref<2x128xf32, #tpu.memory_space<vmem>>) attributes {dimension_semantics = [#tpu.dimension_semantics<arbitrary>], iteration_bounds = array<i64: 1>, scalar_prefetch = 0 : i64, scratch_operands = 0 : i64, tpu.core_type = #tpu.core_type<tc>, window_params = [{pipeline_mode = #tpu.pipeline_mode<synchronous>, transform_indices = @transform_0, window_bounds = array<i64: 16, 64>}, {pipeline_mode = #tpu.pipeline_mode<synchronous>, transform_indices = @transform_1, window_bounds = array<i64: 16, 16>}, {pipeline_mode = #tpu.pipeline_mode<synchronous>, transform_indices = @transform_2, window_bounds = array<i64: 2, 16>}, {pipeline_mode = #tpu.pipeline_mode<synchronous>, transform_indices = @transform_3, window_bounds = array<i64: 1, 64>}, {pipeline_mode = #tpu.pipeline_mode<synchronous>, transform_indices = @transform_4, window_bounds = array<i64: 1, 64>}, {pipeline_mode = #tpu.pipeline_mode<synchronous>, transform_indices = @transform_5, window_bounds = array<i64: 64, 192>}, {pipeline_mode = #tpu.pipeline_mode<synchronous>, transform_indices = @transform_6, window_bounds = array<i64: 1, 192>}, {pipeline_mode = #tpu.pipeline_mode<synchronous>, transform_indices = @transform_7, window_bounds = array<i64: 64, 64>}, {pipeline_mode = #tpu.pipeline_mode<synchronous>, transform_indices = @transform_8, window_bounds = array<i64: 1, 64>}, {pipeline_mode = #tpu.pipeline_mode<synchronous>, transform_indices = @transform_9, window_bounds = array<i64: 1, 64>}, {pipeline_mode = #tpu.pipeline_mode<synchronous>, transform_indices = @transform_10, window_bounds = array<i64: 1, 64>}, {pipeline_mode = #tpu.pipeline_mode<synchronous>, transform_indices = @transform_11, window_bounds = array<i64: 64, 256>}, {pipeline_mode = #tpu.pipeline_mode<synchronous>, transform_indices = @transform_12, window_bounds = array<i64: 1, 256>}, {pipeline_mode = #tpu.pipeline_mode<synchronous>, transform_indices = @transform_13, window_bounds = array<i64: 256, 64>}, {pipeline_mode = #tpu.pipeline_mode<synchronous>, transform_indices = @transform_14, window_bounds = array<i64: 1, 64>}, {pipeline_mode = #tpu.pipeline_mode<synchronous>, transform_indices = @transform_15, window_bounds = array<i64: 1, 64>}, {pipeline_mode = #tpu.pipeline_mode<synchronous>, transform_indices = @transform_16, window_bounds = array<i64: 1, 64>}, {pipeline_mode = #tpu.pipeline_mode<synchronous>, transform_indices = @transform_17, window_bounds = array<i64: 64, 128>}, {pipeline_mode = #tpu.pipeline_mode<synchronous>, transform_indices = @transform_18, window_bounds = array<i64: 1, 128>}, {pipeline_mode = #tpu.pipeline_mode<synchronous>, transform_indices = @transform_19, window_bounds = array<i64: 2, 128>}]} {
    %c0 = arith.constant 0 : index
    %c0_0 = arith.constant 0 : index
    %0 = vector.load %arg1[%c0, %c0_0] : memref<16x64xf32, #tpu.memory_space<vmem>>, vector<16x64xf32>
    %c0_1 = arith.constant 0 : index
    %c0_2 = arith.constant 0 : index
    %1 = vector.load %arg2[%c0_1, %c0_2] : memref<16x16xf32, #tpu.memory_space<vmem>>, vector<16x16xf32>
    %c0_3 = arith.constant 0 : index
    %c0_4 = arith.constant 0 : index
    %2 = vector.load %arg4[%c0_3, %c0_4] : memref<1x64xf32, #tpu.memory_space<vmem>>, vector<1x64xf32>
    %c0_5 = arith.constant 0 : index
    %c0_6 = arith.constant 0 : index
    %3 = vector.load %arg5[%c0_5, %c0_6] : memref<1x64xf32, #tpu.memory_space<vmem>>, vector<1x64xf32>
    %cst = arith.constant dense<0.000000e+00> : vector<16xf32>
    %4 = vector.multi_reduction <add>, %0, %cst [1] : vector<16x64xf32> to vector<16xf32>
    %5 = vector.shape_cast %4 : vector<16xf32> to vector<16x1xf32>
    %cst_7 = arith.constant 6.400000e+01 : f32
    %6 = vector.broadcast %cst_7 : f32 to vector<16x1xf32>
    %7 = arith.divf %5, %6 : vector<16x1xf32>
    %8 = vector.broadcast %7 : vector<16x1xf32> to vector<16x64xf32>
    %9 = arith.subf %0, %8 : vector<16x64xf32>
    %10 = arith.mulf %9, %9 : vector<16x64xf32>
    %cst_8 = arith.constant dense<0.000000e+00> : vector<16xf32>
    %11 = vector.multi_reduction <add>, %10, %cst_8 [1] : vector<16x64xf32> to vector<16xf32>
    %12 = vector.shape_cast %11 : vector<16xf32> to vector<16x1xf32>
    %cst_9 = arith.constant 6.400000e+01 : f32
    %13 = vector.broadcast %cst_9 : f32 to vector<16x1xf32>
    %14 = arith.divf %12, %13 : vector<16x1xf32>
    %15 = vector.broadcast %7 : vector<16x1xf32> to vector<16x64xf32>
    %16 = arith.subf %0, %15 : vector<16x64xf32>
    %cst_10 = arith.constant 9.99999974E-6 : f32
    %17 = vector.broadcast %cst_10 : f32 to vector<16x1xf32>
    %18 = arith.addf %14, %17 : vector<16x1xf32>
    %19 = math.rsqrt %18 : vector<16x1xf32>
    %20 = vector.broadcast %19 : vector<16x1xf32> to vector<16x64xf32>
    %21 = arith.mulf %16, %20 : vector<16x64xf32>
    %22 = vector.broadcast %2 : vector<1x64xf32> to vector<16x64xf32>
    %23 = arith.mulf %21, %22 : vector<16x64xf32>
    %24 = vector.broadcast %3 : vector<1x64xf32> to vector<16x64xf32>
    %25 = arith.addf %23, %24 : vector<16x64xf32>
    %c0_11 = arith.constant 0 : index
    %c0_12 = arith.constant 0 : index
    %26 = vector.load %arg6[%c0_11, %c0_12] : memref<64x192xf32, #tpu.memory_space<vmem>>, vector<64x192xf32>
    %cst_13 = arith.constant dense<0.000000e+00> : vector<16x192xf32>
    %27 = tpu.matmul %25, %26, %cst_13 {dimension_numbers = #tpu.dot_dimension_numbers<[1], [0], [0], [1], [0, 0, 1, 1], [], []>} : vector<16x64xf32>, vector<64x192xf32>, vector<16x192xf32> -> vector<16x192xf32>
    %c0_14 = arith.constant 0 : index
    %c0_15 = arith.constant 0 : index
    %28 = vector.load %arg7[%c0_14, %c0_15] : memref<1x192xf32, #tpu.memory_space<vmem>>, vector<1x192xf32>
    %29 = vector.broadcast %28 : vector<1x192xf32> to vector<16x192xf32>
    %30 = arith.addf %27, %29 : vector<16x192xf32>
    %cst_16 = arith.constant 0.000000e+00 : f32
    %31 = vector.broadcast %cst_16 : f32 to vector<16x64xf32>
    %32 = vector.extract_strided_slice %30 {offsets = [0, 0], sizes = [16, 16], strides = [1, 1]} : vector<16x192xf32> to vector<16x16xf32>
    %33 = vector.extract_strided_slice %30 {offsets = [0, 64], sizes = [16, 16], strides = [1, 1]} : vector<16x192xf32> to vector<16x16xf32>
    %34 = vector.extract_strided_slice %30 {offsets = [0, 128], sizes = [16, 16], strides = [1, 1]} : vector<16x192xf32> to vector<16x16xf32>
    %cst_17 = arith.constant dense<0.000000e+00> : vector<16x16xf32>
    %35 = tpu.matmul %32, %33, %cst_17 {dimension_numbers = #tpu.dot_dimension_numbers<[1], [1], [0], [0], [0, 0, 1, 0], [], []>} : vector<16x16xf32>, vector<16x16xf32>, vector<16x16xf32> -> vector<16x16xf32>
    %cst_18 = arith.constant 2.500000e-01 : f32
    %36 = vector.broadcast %cst_18 : f32 to vector<16x16xf32>
    %37 = arith.mulf %35, %36 : vector<16x16xf32>
    %38 = arith.addf %37, %1 : vector<16x16xf32>
    %cst_19 = arith.constant dense<0xFF800000> : vector<16xf32>
    %39 = vector.multi_reduction <maximumf>, %38, %cst_19 [1] : vector<16x16xf32> to vector<16xf32>
    %40 = vector.shape_cast %39 : vector<16xf32> to vector<16x1xf32>
    %41 = vector.broadcast %40 : vector<16x1xf32> to vector<16x16xf32>
    %42 = arith.subf %38, %41 : vector<16x16xf32>
    %43 = math.exp %42 : vector<16x16xf32>
    %cst_20 = arith.constant dense<0.000000e+00> : vector<16xf32>
    %44 = vector.multi_reduction <add>, %43, %cst_20 [1] : vector<16x16xf32> to vector<16xf32>
    %45 = vector.shape_cast %44 : vector<16xf32> to vector<16x1xf32>
    %46 = tpu.reciprocal %45 {approx = true} : vector<16x1xf32> -> vector<16x1xf32>
    %47 = vector.broadcast %46 : vector<16x1xf32> to vector<16x16xf32>
    %48 = arith.mulf %43, %47 : vector<16x16xf32>
    %cst_21 = arith.constant dense<0.000000e+00> : vector<16x16xf32>
    %49 = tpu.matmul %48, %34, %cst_21 {dimension_numbers = #tpu.dot_dimension_numbers<[1], [0], [0], [1], [0, 0, 1, 1], [], []>} : vector<16x16xf32>, vector<16x16xf32>, vector<16x16xf32> -> vector<16x16xf32>
    %c0_22 = arith.constant 0 : index
    %c0_23 = arith.constant 0 : index
    %50 = vector.load %arg8[%c0_22, %c0_23] : memref<64x64xf32, #tpu.memory_space<vmem>>, vector<16x64xf32>
    %cst_24 = arith.constant dense<0.000000e+00> : vector<16x64xf32>
    %51 = tpu.matmul %49, %50, %cst_24 {dimension_numbers = #tpu.dot_dimension_numbers<[1], [0], [0], [1], [0, 0, 1, 1], [], []>} : vector<16x16xf32>, vector<16x64xf32>, vector<16x64xf32> -> vector<16x64xf32>
    %52 = arith.addf %31, %51 : vector<16x64xf32>
    %53 = vector.extract_strided_slice %30 {offsets = [0, 16], sizes = [16, 16], strides = [1, 1]} : vector<16x192xf32> to vector<16x16xf32>
    %54 = vector.extract_strided_slice %30 {offsets = [0, 80], sizes = [16, 16], strides = [1, 1]} : vector<16x192xf32> to vector<16x16xf32>
    %55 = vector.extract_strided_slice %30 {offsets = [0, 144], sizes = [16, 16], strides = [1, 1]} : vector<16x192xf32> to vector<16x16xf32>
    %cst_25 = arith.constant dense<0.000000e+00> : vector<16x16xf32>
    %56 = tpu.matmul %53, %54, %cst_25 {dimension_numbers = #tpu.dot_dimension_numbers<[1], [1], [0], [0], [0, 0, 1, 0], [], []>} : vector<16x16xf32>, vector<16x16xf32>, vector<16x16xf32> -> vector<16x16xf32>
    %cst_26 = arith.constant 2.500000e-01 : f32
    %57 = vector.broadcast %cst_26 : f32 to vector<16x16xf32>
    %58 = arith.mulf %56, %57 : vector<16x16xf32>
    %59 = arith.addf %58, %1 : vector<16x16xf32>
    %cst_27 = arith.constant dense<0xFF800000> : vector<16xf32>
    %60 = vector.multi_reduction <maximumf>, %59, %cst_27 [1] : vector<16x16xf32> to vector<16xf32>
    %61 = vector.shape_cast %60 : vector<16xf32> to vector<16x1xf32>
    %62 = vector.broadcast %61 : vector<16x1xf32> to vector<16x16xf32>
    %63 = arith.subf %59, %62 : vector<16x16xf32>
    %64 = math.exp %63 : vector<16x16xf32>
    %cst_28 = arith.constant dense<0.000000e+00> : vector<16xf32>
    %65 = vector.multi_reduction <add>, %64, %cst_28 [1] : vector<16x16xf32> to vector<16xf32>
    %66 = vector.shape_cast %65 : vector<16xf32> to vector<16x1xf32>
    %67 = tpu.reciprocal %66 {approx = true} : vector<16x1xf32> -> vector<16x1xf32>
    %68 = vector.broadcast %67 : vector<16x1xf32> to vector<16x16xf32>
    %69 = arith.mulf %64, %68 : vector<16x16xf32>
    %cst_29 = arith.constant dense<0.000000e+00> : vector<16x16xf32>
    %70 = tpu.matmul %69, %55, %cst_29 {dimension_numbers = #tpu.dot_dimension_numbers<[1], [0], [0], [1], [0, 0, 1, 1], [], []>} : vector<16x16xf32>, vector<16x16xf32>, vector<16x16xf32> -> vector<16x16xf32>
    %c16 = arith.constant 16 : index
    %c0_30 = arith.constant 0 : index
    %71 = vector.load %arg8[%c16, %c0_30] : memref<64x64xf32, #tpu.memory_space<vmem>>, vector<16x64xf32>
    %cst_31 = arith.constant dense<0.000000e+00> : vector<16x64xf32>
    %72 = tpu.matmul %70, %71, %cst_31 {dimension_numbers = #tpu.dot_dimension_numbers<[1], [0], [0], [1], [0, 0, 1, 1], [], []>} : vector<16x16xf32>, vector<16x64xf32>, vector<16x64xf32> -> vector<16x64xf32>
    %73 = arith.addf %52, %72 : vector<16x64xf32>
    %74 = vector.extract_strided_slice %30 {offsets = [0, 32], sizes = [16, 16], strides = [1, 1]} : vector<16x192xf32> to vector<16x16xf32>
    %75 = vector.extract_strided_slice %30 {offsets = [0, 96], sizes = [16, 16], strides = [1, 1]} : vector<16x192xf32> to vector<16x16xf32>
    %76 = vector.extract_strided_slice %30 {offsets = [0, 160], sizes = [16, 16], strides = [1, 1]} : vector<16x192xf32> to vector<16x16xf32>
    %cst_32 = arith.constant dense<0.000000e+00> : vector<16x16xf32>
    %77 = tpu.matmul %74, %75, %cst_32 {dimension_numbers = #tpu.dot_dimension_numbers<[1], [1], [0], [0], [0, 0, 1, 0], [], []>} : vector<16x16xf32>, vector<16x16xf32>, vector<16x16xf32> -> vector<16x16xf32>
    %cst_33 = arith.constant 2.500000e-01 : f32
    %78 = vector.broadcast %cst_33 : f32 to vector<16x16xf32>
    %79 = arith.mulf %77, %78 : vector<16x16xf32>
    %80 = arith.addf %79, %1 : vector<16x16xf32>
    %cst_34 = arith.constant dense<0xFF800000> : vector<16xf32>
    %81 = vector.multi_reduction <maximumf>, %80, %cst_34 [1] : vector<16x16xf32> to vector<16xf32>
    %82 = vector.shape_cast %81 : vector<16xf32> to vector<16x1xf32>
    %83 = vector.broadcast %82 : vector<16x1xf32> to vector<16x16xf32>
    %84 = arith.subf %80, %83 : vector<16x16xf32>
    %85 = math.exp %84 : vector<16x16xf32>
    %cst_35 = arith.constant dense<0.000000e+00> : vector<16xf32>
    %86 = vector.multi_reduction <add>, %85, %cst_35 [1] : vector<16x16xf32> to vector<16xf32>
    %87 = vector.shape_cast %86 : vector<16xf32> to vector<16x1xf32>
    %88 = tpu.reciprocal %87 {approx = true} : vector<16x1xf32> -> vector<16x1xf32>
    %89 = vector.broadcast %88 : vector<16x1xf32> to vector<16x16xf32>
    %90 = arith.mulf %85, %89 : vector<16x16xf32>
    %cst_36 = arith.constant dense<0.000000e+00> : vector<16x16xf32>
    %91 = tpu.matmul %90, %76, %cst_36 {dimension_numbers = #tpu.dot_dimension_numbers<[1], [0], [0], [1], [0, 0, 1, 1], [], []>} : vector<16x16xf32>, vector<16x16xf32>, vector<16x16xf32> -> vector<16x16xf32>
    %c32 = arith.constant 32 : index
    %c0_37 = arith.constant 0 : index
    %92 = vector.load %arg8[%c32, %c0_37] : memref<64x64xf32, #tpu.memory_space<vmem>>, vector<16x64xf32>
    %cst_38 = arith.constant dense<0.000000e+00> : vector<16x64xf32>
    %93 = tpu.matmul %91, %92, %cst_38 {dimension_numbers = #tpu.dot_dimension_numbers<[1], [0], [0], [1], [0, 0, 1, 1], [], []>} : vector<16x16xf32>, vector<16x64xf32>, vector<16x64xf32> -> vector<16x64xf32>
    %94 = arith.addf %73, %93 : vector<16x64xf32>
    %95 = vector.extract_strided_slice %30 {offsets = [0, 48], sizes = [16, 16], strides = [1, 1]} : vector<16x192xf32> to vector<16x16xf32>
    %96 = vector.extract_strided_slice %30 {offsets = [0, 112], sizes = [16, 16], strides = [1, 1]} : vector<16x192xf32> to vector<16x16xf32>
    %97 = vector.extract_strided_slice %30 {offsets = [0, 176], sizes = [16, 16], strides = [1, 1]} : vector<16x192xf32> to vector<16x16xf32>
    %cst_39 = arith.constant dense<0.000000e+00> : vector<16x16xf32>
    %98 = tpu.matmul %95, %96, %cst_39 {dimension_numbers = #tpu.dot_dimension_numbers<[1], [1], [0], [0], [0, 0, 1, 0], [], []>} : vector<16x16xf32>, vector<16x16xf32>, vector<16x16xf32> -> vector<16x16xf32>
    %cst_40 = arith.constant 2.500000e-01 : f32
    %99 = vector.broadcast %cst_40 : f32 to vector<16x16xf32>
    %100 = arith.mulf %98, %99 : vector<16x16xf32>
    %101 = arith.addf %100, %1 : vector<16x16xf32>
    %cst_41 = arith.constant dense<0xFF800000> : vector<16xf32>
    %102 = vector.multi_reduction <maximumf>, %101, %cst_41 [1] : vector<16x16xf32> to vector<16xf32>
    %103 = vector.shape_cast %102 : vector<16xf32> to vector<16x1xf32>
    %104 = vector.broadcast %103 : vector<16x1xf32> to vector<16x16xf32>
    %105 = arith.subf %101, %104 : vector<16x16xf32>
    %106 = math.exp %105 : vector<16x16xf32>
    %cst_42 = arith.constant dense<0.000000e+00> : vector<16xf32>
    %107 = vector.multi_reduction <add>, %106, %cst_42 [1] : vector<16x16xf32> to vector<16xf32>
    %108 = vector.shape_cast %107 : vector<16xf32> to vector<16x1xf32>
    %109 = tpu.reciprocal %108 {approx = true} : vector<16x1xf32> -> vector<16x1xf32>
    %110 = vector.broadcast %109 : vector<16x1xf32> to vector<16x16xf32>
    %111 = arith.mulf %106, %110 : vector<16x16xf32>
    %cst_43 = arith.constant dense<0.000000e+00> : vector<16x16xf32>
    %112 = tpu.matmul %111, %97, %cst_43 {dimension_numbers = #tpu.dot_dimension_numbers<[1], [0], [0], [1], [0, 0, 1, 1], [], []>} : vector<16x16xf32>, vector<16x16xf32>, vector<16x16xf32> -> vector<16x16xf32>
    %c48 = arith.constant 48 : index
    %c0_44 = arith.constant 0 : index
    %113 = vector.load %arg8[%c48, %c0_44] : memref<64x64xf32, #tpu.memory_space<vmem>>, vector<16x64xf32>
    %cst_45 = arith.constant dense<0.000000e+00> : vector<16x64xf32>
    %114 = tpu.matmul %112, %113, %cst_45 {dimension_numbers = #tpu.dot_dimension_numbers<[1], [0], [0], [1], [0, 0, 1, 1], [], []>} : vector<16x16xf32>, vector<16x64xf32>, vector<16x64xf32> -> vector<16x64xf32>
    %115 = arith.addf %94, %114 : vector<16x64xf32>
    %116 = arith.addf %0, %115 : vector<16x64xf32>
    %c0_46 = arith.constant 0 : index
    %c0_47 = arith.constant 0 : index
    %117 = vector.load %arg9[%c0_46, %c0_47] : memref<1x64xf32, #tpu.memory_space<vmem>>, vector<1x64xf32>
    %118 = vector.broadcast %117 : vector<1x64xf32> to vector<16x64xf32>
    %119 = arith.addf %116, %118 : vector<16x64xf32>
    %c0_48 = arith.constant 0 : index
    %c0_49 = arith.constant 0 : index
    %120 = vector.load %arg10[%c0_48, %c0_49] : memref<1x64xf32, #tpu.memory_space<vmem>>, vector<1x64xf32>
    %c0_50 = arith.constant 0 : index
    %c0_51 = arith.constant 0 : index
    %121 = vector.load %arg11[%c0_50, %c0_51] : memref<1x64xf32, #tpu.memory_space<vmem>>, vector<1x64xf32>
    %cst_52 = arith.constant dense<0.000000e+00> : vector<16xf32>
    %122 = vector.multi_reduction <add>, %119, %cst_52 [1] : vector<16x64xf32> to vector<16xf32>
    %123 = vector.shape_cast %122 : vector<16xf32> to vector<16x1xf32>
    %cst_53 = arith.constant 6.400000e+01 : f32
    %124 = vector.broadcast %cst_53 : f32 to vector<16x1xf32>
    %125 = arith.divf %123, %124 : vector<16x1xf32>
    %126 = vector.broadcast %125 : vector<16x1xf32> to vector<16x64xf32>
    %127 = arith.subf %119, %126 : vector<16x64xf32>
    %128 = arith.mulf %127, %127 : vector<16x64xf32>
    %cst_54 = arith.constant dense<0.000000e+00> : vector<16xf32>
    %129 = vector.multi_reduction <add>, %128, %cst_54 [1] : vector<16x64xf32> to vector<16xf32>
    %130 = vector.shape_cast %129 : vector<16xf32> to vector<16x1xf32>
    %cst_55 = arith.constant 6.400000e+01 : f32
    %131 = vector.broadcast %cst_55 : f32 to vector<16x1xf32>
    %132 = arith.divf %130, %131 : vector<16x1xf32>
    %133 = vector.broadcast %125 : vector<16x1xf32> to vector<16x64xf32>
    %134 = arith.subf %119, %133 : vector<16x64xf32>
    %cst_56 = arith.constant 9.99999974E-6 : f32
    %135 = vector.broadcast %cst_56 : f32 to vector<16x1xf32>
    %136 = arith.addf %132, %135 : vector<16x1xf32>
    %137 = math.rsqrt %136 : vector<16x1xf32>
    %138 = vector.broadcast %137 : vector<16x1xf32> to vector<16x64xf32>
    %139 = arith.mulf %134, %138 : vector<16x64xf32>
    %140 = vector.broadcast %120 : vector<1x64xf32> to vector<16x64xf32>
    %141 = arith.mulf %139, %140 : vector<16x64xf32>
    %142 = vector.broadcast %121 : vector<1x64xf32> to vector<16x64xf32>
    %143 = arith.addf %141, %142 : vector<16x64xf32>
    %c0_57 = arith.constant 0 : index
    %c0_58 = arith.constant 0 : index
    %144 = vector.load %arg12[%c0_57, %c0_58] : memref<64x256xf32, #tpu.memory_space<vmem>>, vector<64x256xf32>
    %cst_59 = arith.constant dense<0.000000e+00> : vector<16x256xf32>
    %145 = tpu.matmul %143, %144, %cst_59 {dimension_numbers = #tpu.dot_dimension_numbers<[1], [0], [0], [1], [0, 0, 1, 1], [], []>} : vector<16x64xf32>, vector<64x256xf32>, vector<16x256xf32> -> vector<16x256xf32>
    %c0_60 = arith.constant 0 : index
    %c0_61 = arith.constant 0 : index
    %146 = vector.load %arg13[%c0_60, %c0_61] : memref<1x256xf32, #tpu.memory_space<vmem>>, vector<1x256xf32>
    %147 = vector.broadcast %146 : vector<1x256xf32> to vector<16x256xf32>
    %148 = arith.addf %145, %147 : vector<16x256xf32>
    %cst_62 = arith.constant 5.000000e-01 : f32
    %149 = vector.broadcast %cst_62 : f32 to vector<16x256xf32>
    %150 = arith.mulf %149, %148 : vector<16x256xf32>
    %cst_63 = arith.constant 4.471500e-02 : f32
    %151 = vector.broadcast %cst_63 : f32 to vector<16x256xf32>
    %152 = arith.mulf %151, %148 : vector<16x256xf32>
    %153 = arith.mulf %152, %148 : vector<16x256xf32>
    %154 = arith.mulf %153, %148 : vector<16x256xf32>
    %155 = arith.addf %148, %154 : vector<16x256xf32>
    %cst_64 = arith.constant 0.797884583 : f32
    %156 = vector.broadcast %cst_64 : f32 to vector<16x256xf32>
    %157 = arith.mulf %156, %155 : vector<16x256xf32>
    %158 = math.tanh %157 : vector<16x256xf32>
    %cst_65 = arith.constant 1.000000e+00 : f32
    %159 = vector.broadcast %cst_65 : f32 to vector<16x256xf32>
    %160 = arith.addf %159, %158 : vector<16x256xf32>
    %161 = arith.mulf %150, %160 : vector<16x256xf32>
    %c0_66 = arith.constant 0 : index
    %c0_67 = arith.constant 0 : index
    %162 = vector.load %arg14[%c0_66, %c0_67] : memref<256x64xf32, #tpu.memory_space<vmem>>, vector<256x64xf32>
    %cst_68 = arith.constant dense<0.000000e+00> : vector<16x64xf32>
    %163 = tpu.matmul %161, %162, %cst_68 {dimension_numbers = #tpu.dot_dimension_numbers<[1], [0], [0], [1], [0, 0, 1, 1], [], []>} : vector<16x256xf32>, vector<256x64xf32>, vector<16x64xf32> -> vector<16x64xf32>
    %164 = arith.addf %119, %163 : vector<16x64xf32>
    %c0_69 = arith.constant 0 : index
    %c0_70 = arith.constant 0 : index
    %165 = vector.load %arg15[%c0_69, %c0_70] : memref<1x64xf32, #tpu.memory_space<vmem>>, vector<1x64xf32>
    %166 = vector.broadcast %165 : vector<1x64xf32> to vector<16x64xf32>
    %167 = arith.addf %164, %166 : vector<16x64xf32>
    %c0_71 = arith.constant 0 : index
    %c0_72 = arith.constant 0 : index
    %168 = vector.load %arg16[%c0_71, %c0_72] : memref<1x64xf32, #tpu.memory_space<vmem>>, vector<1x64xf32>
    %c0_73 = arith.constant 0 : index
    %c0_74 = arith.constant 0 : index
    %169 = vector.load %arg17[%c0_73, %c0_74] : memref<1x64xf32, #tpu.memory_space<vmem>>, vector<1x64xf32>
    %cst_75 = arith.constant dense<0.000000e+00> : vector<16xf32>
    %170 = vector.multi_reduction <add>, %167, %cst_75 [1] : vector<16x64xf32> to vector<16xf32>
    %171 = vector.shape_cast %170 : vector<16xf32> to vector<16x1xf32>
    %cst_76 = arith.constant 6.400000e+01 : f32
    %172 = vector.broadcast %cst_76 : f32 to vector<16x1xf32>
    %173 = arith.divf %171, %172 : vector<16x1xf32>
    %174 = vector.broadcast %173 : vector<16x1xf32> to vector<16x64xf32>
    %175 = arith.subf %167, %174 : vector<16x64xf32>
    %176 = arith.mulf %175, %175 : vector<16x64xf32>
    %cst_77 = arith.constant dense<0.000000e+00> : vector<16xf32>
    %177 = vector.multi_reduction <add>, %176, %cst_77 [1] : vector<16x64xf32> to vector<16xf32>
    %178 = vector.shape_cast %177 : vector<16xf32> to vector<16x1xf32>
    %cst_78 = arith.constant 6.400000e+01 : f32
    %179 = vector.broadcast %cst_78 : f32 to vector<16x1xf32>
    %180 = arith.divf %178, %179 : vector<16x1xf32>
    %181 = vector.broadcast %173 : vector<16x1xf32> to vector<16x64xf32>
    %182 = arith.subf %167, %181 : vector<16x64xf32>
    %cst_79 = arith.constant 9.99999974E-6 : f32
    %183 = vector.broadcast %cst_79 : f32 to vector<16x1xf32>
    %184 = arith.addf %180, %183 : vector<16x1xf32>
    %185 = math.rsqrt %184 : vector<16x1xf32>
    %186 = vector.broadcast %185 : vector<16x1xf32> to vector<16x64xf32>
    %187 = arith.mulf %182, %186 : vector<16x64xf32>
    %188 = vector.broadcast %168 : vector<1x64xf32> to vector<16x64xf32>
    %189 = arith.mulf %187, %188 : vector<16x64xf32>
    %190 = vector.broadcast %169 : vector<1x64xf32> to vector<16x64xf32>
    %191 = arith.addf %189, %190 : vector<16x64xf32>
    %c0_80 = arith.constant 0 : index
    %c0_81 = arith.constant 0 : index
    %192 = vector.load %arg3[%c0_80, %c0_81] : memref<2x16xf32, #tpu.memory_space<vmem>>, vector<2x16xf32>
    %cst_82 = arith.constant dense<0.000000e+00> : vector<2x64xf32>
    %193 = tpu.matmul %192, %191, %cst_82 {dimension_numbers = #tpu.dot_dimension_numbers<[1], [0], [0], [1], [0, 0, 1, 1], [], []>} : vector<2x16xf32>, vector<16x64xf32>, vector<2x64xf32> -> vector<2x64xf32>
    %c0_83 = arith.constant 0 : index
    %c0_84 = arith.constant 0 : index
    %194 = vector.load %arg18[%c0_83, %c0_84] : memref<64x128xf32, #tpu.memory_space<vmem>>, vector<64x128xf32>
    %cst_85 = arith.constant dense<0.000000e+00> : vector<2x128xf32>
    %195 = tpu.matmul %193, %194, %cst_85 {dimension_numbers = #tpu.dot_dimension_numbers<[1], [0], [0], [1], [0, 0, 1, 1], [], []>} : vector<2x64xf32>, vector<64x128xf32>, vector<2x128xf32> -> vector<2x128xf32>
    %c0_86 = arith.constant 0 : index
    %c0_87 = arith.constant 0 : index
    %196 = vector.load %arg19[%c0_86, %c0_87] : memref<1x128xf32, #tpu.memory_space<vmem>>, vector<1x128xf32>
    %197 = vector.broadcast %196 : vector<1x128xf32> to vector<2x128xf32>
    %198 = arith.addf %195, %197 : vector<2x128xf32>
    %c0_88 = arith.constant 0 : index
    %c0_89 = arith.constant 0 : index
    %199 = vector.load %arg20[%c0_88, %c0_89] : memref<2x128xf32, #tpu.memory_space<vmem>>, vector<2x128xf32>
    tpu.vector_store %arg20[%c0_88, %c0_89], %198 {strides = array<i32>} : memref<2x128xf32, #tpu.memory_space<vmem>>, vector<2x128xf32>,
    return
  }
  func.func @transform_0(%arg0: i32) -> (i32, i32) {
    %c0_i32 = arith.constant 0 : i32
    %c0_i32_0 = arith.constant 0 : i32
    %c0_i32_1 = arith.constant 0 : i32
    return %c0_i32, %c0_i32_0 : i32, i32
  }
  func.func @transform_1(%arg0: i32) -> (i32, i32) {
    %c0_i32 = arith.constant 0 : i32
    %c0_i32_0 = arith.constant 0 : i32
    %c0_i32_1 = arith.constant 0 : i32
    return %c0_i32, %c0_i32_0 : i32, i32
  }
  func.func @transform_2(%arg0: i32) -> (i32, i32) {
    %c0_i32 = arith.constant 0 : i32
    %c0_i32_0 = arith.constant 0 : i32
    %c0_i32_1 = arith.constant 0 : i32
    return %c0_i32, %c0_i32_0 : i32, i32
  }
  func.func @transform_3(%arg0: i32) -> (i32, i32) {
    %c0_i32 = arith.constant 0 : i32
    %c0_i32_0 = arith.constant 0 : i32
    %c0_i32_1 = arith.constant 0 : i32
    return %c0_i32, %c0_i32_0 : i32, i32
  }
  func.func @transform_4(%arg0: i32) -> (i32, i32) {
    %c0_i32 = arith.constant 0 : i32
    %c0_i32_0 = arith.constant 0 : i32
    %c0_i32_1 = arith.constant 0 : i32
    return %c0_i32, %c0_i32_0 : i32, i32
  }
  func.func @transform_5(%arg0: i32) -> (i32, i32) {
    %c0_i32 = arith.constant 0 : i32
    %c0_i32_0 = arith.constant 0 : i32
    %c0_i32_1 = arith.constant 0 : i32
    return %c0_i32, %c0_i32_0 : i32, i32
  }
  func.func @transform_6(%arg0: i32) -> (i32, i32) {
    %c0_i32 = arith.constant 0 : i32
    %c0_i32_0 = arith.constant 0 : i32
    %c0_i32_1 = arith.constant 0 : i32
    return %c0_i32, %c0_i32_0 : i32, i32
  }
  func.func @transform_7(%arg0: i32) -> (i32, i32) {
    %c0_i32 = arith.constant 0 : i32
    %c0_i32_0 = arith.constant 0 : i32
    %c0_i32_1 = arith.constant 0 : i32
    return %c0_i32, %c0_i32_0 : i32, i32
  }
  func.func @transform_8(%arg0: i32) -> (i32, i32) {
    %c0_i32 = arith.constant 0 : i32
    %c0_i32_0 = arith.constant 0 : i32
    %c0_i32_1 = arith.constant 0 : i32
    return %c0_i32, %c0_i32_0 : i32, i32
  }
  func.func @transform_9(%arg0: i32) -> (i32, i32) {
    %c0_i32 = arith.constant 0 : i32
    %c0_i32_0 = arith.constant 0 : i32
    %c0_i32_1 = arith.constant 0 : i32
    return %c0_i32, %c0_i32_0 : i32, i32
  }
  func.func @transform_10(%arg0: i32) -> (i32, i32) {
    %c0_i32 = arith.constant 0 : i32
    %c0_i32_0 = arith.constant 0 : i32
    %c0_i32_1 = arith.constant 0 : i32
    return %c0_i32, %c0_i32_0 : i32, i32
  }
  func.func @transform_11(%arg0: i32) -> (i32, i32) {
    %c0_i32 = arith.constant 0 : i32
    %c0_i32_0 = arith.constant 0 : i32
    %c0_i32_1 = arith.constant 0 : i32
    return %c0_i32, %c0_i32_0 : i32, i32
  }
  func.func @transform_12(%arg0: i32) -> (i32, i32) {
    %c0_i32 = arith.constant 0 : i32
    %c0_i32_0 = arith.constant 0 : i32
    %c0_i32_1 = arith.constant 0 : i32
    return %c0_i32, %c0_i32_0 : i32, i32
  }
  func.func @transform_13(%arg0: i32) -> (i32, i32) {
    %c0_i32 = arith.constant 0 : i32
    %c0_i32_0 = arith.constant 0 : i32
    %c0_i32_1 = arith.constant 0 : i32
    return %c0_i32, %c0_i32_0 : i32, i32
  }
  func.func @transform_14(%arg0: i32) -> (i32, i32) {
    %c0_i32 = arith.constant 0 : i32
    %c0_i32_0 = arith.constant 0 : i32
    %c0_i32_1 = arith.constant 0 : i32
    return %c0_i32, %c0_i32_0 : i32, i32
  }
  func.func @transform_15(%arg0: i32) -> (i32, i32) {
    %c0_i32 = arith.constant 0 : i32
    %c0_i32_0 = arith.constant 0 : i32
    %c0_i32_1 = arith.constant 0 : i32
    return %c0_i32, %c0_i32_0 : i32, i32
  }
  func.func @transform_16(%arg0: i32) -> (i32, i32) {
    %c0_i32 = arith.constant 0 : i32
    %c0_i32_0 = arith.constant 0 : i32
    %c0_i32_1 = arith.constant 0 : i32
    return %c0_i32, %c0_i32_0 : i32, i32
  }
  func.func @transform_17(%arg0: i32) -> (i32, i32) {
    %c0_i32 = arith.constant 0 : i32
    %c0_i32_0 = arith.constant 0 : i32
    %c0_i32_1 = arith.constant 0 : i32
    return %c0_i32, %c0_i32_0 : i32, i32
  }
  func.func @transform_18(%arg0: i32) -> (i32, i32) {
    %c0_i32 = arith.constant 0 : i32
    %c0_i32_0 = arith.constant 0 : i32
    %c0_i32_1 = arith.constant 0 : i32
    return %c0_i32, %c0_i32_0 : i32, i32
  }
  func.func @transform_19(%arg0: i32) -> (i32, i32) {
    %c0_i32 = arith.constant 0 : i32
    %c0_i32_0 = arith.constant 0 : i32
    %c0_i32_1 = arith.constant 0 : i32
    return %c0_i32, %c0_i32_0 : i32, i32
  }
}

</mosaic_0001>

<llo_original>
// kernel: tpu_custom_call.1
$region0: #{tpu_custom_call.1}
  #allocation0 [shape = 'u32[]', space=smem, size = 0x4, offset = 0x4, fixed_abs, tag = 'smem constant byte address 0x4 - core index']
  #allocation1 [shape = 'u32[72,128]{1,0:T(1,128)}', space=vmem, size = 0x9000, scoped, tag = 'internal scratch']
  %s0 = inlined_call_operand.hbm [shape: f32[16,64], index: 0, kind: input, shape index: {}]
  %s1 = inlined_call_operand.hbm [shape: f32[16,16], index: 1, kind: input, shape index: {}]
  %s2 = inlined_call_operand.hbm [shape: f32[2,16], index: 2, kind: input, shape index: {}]
  %s3 = inlined_call_operand.hbm [shape: f32[1,64], index: 3, kind: input, shape index: {}]
  %s4 = inlined_call_operand.hbm [shape: f32[1,64], index: 4, kind: input, shape index: {}]
  %s5 = inlined_call_operand.vmem [shape: f32[64,192], index: 5, kind: input, shape index: {}]
  %s6 = inlined_call_operand.vmem [shape: f32[1,192], index: 6, kind: input, shape index: {}]
  %s7 = inlined_call_operand.vmem [shape: f32[64,64], index: 7, kind: input, shape index: {}]
  %s8 = inlined_call_operand.hbm [shape: f32[1,64], index: 8, kind: input, shape index: {}]
  %s9 = inlined_call_operand.hbm [shape: f32[1,64], index: 9, kind: input, shape index: {}]
  %s10 = inlined_call_operand.vmem [shape: f32[1,64], index: 10, kind: input, shape index: {}]
  %s11 = inlined_call_operand.vmem [shape: f32[64,256], index: 11, kind: input, shape index: {}]
  %s12 = inlined_call_operand.vmem [shape: f32[1,256], index: 12, kind: input, shape index: {}]
  %s13 = inlined_call_operand.vmem [shape: f32[256,64], index: 13, kind: input, shape index: {}]
  %s14 = inlined_call_operand.vmem [shape: f32[1,64], index: 14, kind: input, shape index: {}]
  %s15 = inlined_call_operand.vmem [shape: f32[1,64], index: 15, kind: input, shape index: {}]
  %s16 = inlined_call_operand.vmem [shape: f32[1,64], index: 16, kind: input, shape index: {}]
  %s17 = inlined_call_operand.vmem [shape: f32[64,128], index: 17, kind: input, shape index: {}]
  %s18 = inlined_call_operand.vmem [shape: f32[1,128], index: 18, kind: input, shape index: {}]
  %s19 = inlined_call_operand.hbm [shape: f32[2,128], index: 19, kind: output, shape index: {}]
  %s20 = sld [smem:[#allocation0]]
  $region114: #{tpu_custom_call.1} parent=0
    _
  %s22 = ssub.s32 1, %s20
  %s23 = scalar_select 0, %s22, %s20
  $region1: #{tpu_custom_call.1} parent=0
    #allocation2 [shape = 'u8[8192]{0}', space=vmem, size = 0x2000, scoped, tag = 'input window, operand 0, single buffered']
    #allocation3 [shape = 's32[1]{0}', space=sflag, size = 0x4, scoped, tag = 'scoped memory for tpu_custom_call.1']
    #allocation4 [shape = 's32[1]{0}', space=sflag, size = 0x4, scoped, tag = 'scoped memory for tpu_custom_call.1']
    #allocation5 [shape = 'u8[8192]{0}', space=vmem, size = 0x2000, scoped, tag = 'input window, operand 1, single buffered']
    #allocation6 [shape = 's32[1]{0}', space=sflag, size = 0x4, scoped, tag = 'scoped memory for tpu_custom_call.1']
    #allocation7 [shape = 'u8[1024]{0}', space=vmem, size = 0x400, scoped, tag = 'input window, operand 2, single buffered']
    #allocation8 [shape = 'u8[512]{0}', space=vmem, size = 0x400, scoped, tag = 'input window, operand 3, single buffered']
    #allocation9 [shape = 's32[1]{0}', space=sflag, size = 0x4, scoped, tag = 'scoped memory for tpu_custom_call.1']
    #allocation10 [shape = 'u8[512]{0}', space=vmem, size = 0x400, scoped, tag = 'input window, operand 4, single buffered']
    #allocation11 [shape = 'u8[512]{0}', space=vmem, size = 0x400, scoped, tag = 'input window, operand 8, single buffered']
    #allocation12 [shape = 's32[1]{0}', space=sflag, size = 0x4, scoped, tag = 'scoped memory for tpu_custom_call.1']
    #allocation13 [shape = 'u8[512]{0}', space=vmem, size = 0x400, scoped, tag = 'input window, operand 9, single buffered']
    #allocation14 [shape = 'u8[1024]{0}', space=vmem, size = 0x400, scoped, tag = 'output window, operand 0, single buffered']
    %24 = vsyncpa [#allocation3], 0
    %25 = vsyncpa [#allocation6], 0
    %26 = vsyncpa [#allocation9], 0
    %27 = vsyncpa [#allocation12], 0
    %28 = vsyncpa [#allocation4], 0
    // Predicated region
    $region2: #{tpu_custom_call.1} parent=1 // pred_check
      _
    $region3: #{tpu_custom_call.1} parent=1 // pred_check_branch
      %30 = sbr.rel (0) target = $region5
    $region4: #{tpu_custom_call.1} parent=1 // pred_region
      %32 = vsyncadd [#allocation3], 0
      %s33 = sshll.u32 %s0, 4
      %s34 = int_to_ptr.hbm [resolvable:$true] %s33
      %s35 = sshll.u32 [#allocation2], 4
      %s36 = int_to_ptr.vmem [resolvable:$true] %s35
      %41 = dma.hbm_to_vmem [thread:$0]  %s34, 256, %s36, [#allocation3], 128, 128, 8
    $region5: #{tpu_custom_call.1} parent=1 // pred_fallthru
      _
    // Predicated region
    $region6: #{tpu_custom_call.1} parent=1 // pred_check
      _
    $region7: #{tpu_custom_call.1} parent=1 // pred_check_branch
      %43 = sbr.rel (0) target = $region9
    $region8: #{tpu_custom_call.1} parent=1 // pred_region
      %45 = vsyncadd [#allocation6], 0
      %s46 = sshll.u32 %s1, 4
      %s47 = int_to_ptr.hbm [resolvable:$true] %s46
      %s48 = sshll.u32 [#allocation5], 4
      %s49 = int_to_ptr.vmem [resolvable:$true] %s48
      %54 = dma.hbm_to_vmem [thread:$0]  %s47, 256, %s49, [#allocation6], 128, 128, 8
    $region9: #{tpu_custom_call.1} parent=1 // pred_fallthru
      _
    // Predicated region
    $region10: #{tpu_custom_call.1} parent=1 // pred_check
      _
    $region11: #{tpu_custom_call.1} parent=1 // pred_check_branch
      %56 = sbr.rel (0) target = $region13
    $region12: #{tpu_custom_call.1} parent=1 // pred_region
      %58 = vsyncadd [#allocation6], 0
      %s60 = sshll.u32 %s2, 4
      %s61 = int_to_ptr.hbm [resolvable:$true] %s60
      %s62 = sshll.u32 [#allocation7], 4
      %s63 = int_to_ptr.vmem [resolvable:$true] %s62
      %65 = dma.hbm_to_vmem [thread:$0]  %s61, 32, %s63, [#allocation6]
    $region13: #{tpu_custom_call.1} parent=1 // pred_fallthru
      _
    // Predicated region
    $region14: #{tpu_custom_call.1} parent=1 // pred_check
      _
    $region15: #{tpu_custom_call.1} parent=1 // pred_check_branch
      %67 = sbr.rel (0) target = $region17
    $region16: #{tpu_custom_call.1} parent=1 // pred_region
      %69 = vsyncadd [#allocation9], 0
      %s71 = sshll.u32 %s3, 4
      %s72 = int_to_ptr.hbm [resolvable:$true] %s71
      %s73 = sshll.u32 [#allocation8], 4
      %s74 = int_to_ptr.vmem [resolvable:$true] %s73
      %76 = dma.hbm_to_vmem [thread:$0]  %s72, 16, %s74, [#allocation9]
    $region17: #{tpu_custom_call.1} parent=1 // pred_fallthru
      _
    // Predicated region
    $region18: #{tpu_custom_call.1} parent=1 // pred_check
      _
    $region19: #{tpu_custom_call.1} parent=1 // pred_check_branch
      %78 = sbr.rel (0) target = $region21
    $region20: #{tpu_custom_call.1} parent=1 // pred_region
      %80 = vsyncadd [#allocation9], 0
      %s82 = sshll.u32 %s4, 4
      %s83 = int_to_ptr.hbm [resolvable:$true] %s82
      %s84 = sshll.u32 [#allocation10], 4
      %s85 = int_to_ptr.vmem [resolvable:$true] %s84
      %87 = dma.hbm_to_vmem [thread:$0]  %s83, 16, %s85, [#allocation9]
    $region21: #{tpu_custom_call.1} parent=1 // pred_fallthru
      _
    // Predicated region
    $region22: #{tpu_custom_call.1} parent=1 // pred_check
      _
    $region23: #{tpu_custom_call.1} parent=1 // pred_check_branch
      %89 = sbr.rel (0) target = $region25
    $region24: #{tpu_custom_call.1} parent=1 // pred_region
      _
    $region25: #{tpu_custom_call.1} parent=1 // pred_fallthru
      _
    // Predicated region
    $region26: #{tpu_custom_call.1} parent=1 // pred_check
      _
    $region27: #{tpu_custom_call.1} parent=1 // pred_check_branch
      %91 = sbr.rel (0) target = $region29
    $region28: #{tpu_custom_call.1} parent=1 // pred_region
      _
    $region29: #{tpu_custom_call.1} parent=1 // pred_fallthru
      _
    // Predicated region
    $region30: #{tpu_custom_call.1} parent=1 // pred_check
      _
    $region31: #{tpu_custom_call.1} parent=1 // pred_check_branch
      %93 = sbr.rel (0) target = $region33
    $region32: #{tpu_custom_call.1} parent=1 // pred_region
      _
    $region33: #{tpu_custom_call.1} parent=1 // pred_fallthru
      _
    // Predicated region
    $region34: #{tpu_custom_call.1} parent=1 // pred_check
      _
    $region35: #{tpu_custom_call.1} parent=1 // pred_check_branch
      %95 = sbr.rel (0) target = $region37
    $region36: #{tpu_custom_call.1} parent=1 // pred_region
      %97 = vsyncadd [#allocation12], 0
      %s99 = sshll.u32 %s8, 4
      %s100 = int_to_ptr.hbm [resolvable:$true] %s99
      %s101 = sshll.u32 [#allocation11], 4
      %s102 = int_to_ptr.vmem [resolvable:$true] %s101
      %104 = dma.hbm_to_vmem [thread:$0]  %s100, 16, %s102, [#allocation12]
    $region37: #{tpu_custom_call.1} parent=1 // pred_fallthru
      _
    // Predicated region
    $region38: #{tpu_custom_call.1} parent=1 // pred_check
      _
    $region39: #{tpu_custom_call.1} parent=1 // pred_check_branch
      %106 = sbr.rel (0) target = $region41
    $region40: #{tpu_custom_call.1} parent=1 // pred_region
      %108 = vsyncadd [#allocation12], 0
      %s110 = sshll.u32 %s9, 4
      %s111 = int_to_ptr.hbm [resolvable:$true] %s110
      %s112 = sshll.u32 [#allocation13], 4
      %s113 = int_to_ptr.vmem [resolvable:$true] %s112
      %115 = dma.hbm_to_vmem [thread:$0]  %s111, 16, %s113, [#allocation12]
    $region41: #{tpu_custom_call.1} parent=1 // pred_fallthru
      _
    // Predicated region
    $region42: #{tpu_custom_call.1} parent=1 // pred_check
      _
    $region43: #{tpu_custom_call.1} parent=1 // pred_check_branch
      %117 = sbr.rel (0) target = $region45
    $region44: #{tpu_custom_call.1} parent=1 // pred_region
      _
    $region45: #{tpu_custom_call.1} parent=1 // pred_fallthru
      _
    // Predicated region
    $region46: #{tpu_custom_call.1} parent=1 // pred_check
      _
    $region47: #{tpu_custom_call.1} parent=1 // pred_check_branch
      %119 = sbr.rel (0) target = $region49
    $region48: #{tpu_custom_call.1} parent=1 // pred_region
      _
    $region49: #{tpu_custom_call.1} parent=1 // pred_fallthru
      _
    // Predicated region
    $region50: #{tpu_custom_call.1} parent=1 // pred_check
      _
    $region51: #{tpu_custom_call.1} parent=1 // pred_check_branch
      %121 = sbr.rel (0) target = $region53
    $region52: #{tpu_custom_call.1} parent=1 // pred_region
      _
    $region53: #{tpu_custom_call.1} parent=1 // pred_fallthru
      _
    // Predicated region
    $region54: #{tpu_custom_call.1} parent=1 // pred_check
      _
    $region55: #{tpu_custom_call.1} parent=1 // pred_check_branch
      %123 = sbr.rel (0) target = $region57
    $region56: #{tpu_custom_call.1} parent=1 // pred_region
      _
    $region57: #{tpu_custom_call.1} parent=1 // pred_fallthru
      _
    // Predicated region
    $region58: #{tpu_custom_call.1} parent=1 // pred_check
      _
    $region59: #{tpu_custom_call.1} parent=1 // pred_check_branch
      %125 = sbr.rel (0) target = $region61
    $region60: #{tpu_custom_call.1} parent=1 // pred_region
      _
    $region61: #{tpu_custom_call.1} parent=1 // pred_fallthru
      _
    // Predicated region
    $region62: #{tpu_custom_call.1} parent=1 // pred_check
      _
    $region63: #{tpu_custom_call.1} parent=1 // pred_check_branch
      %127 = sbr.rel (0) target = $region65
    $region64: #{tpu_custom_call.1} parent=1 // pred_region
      _
    $region65: #{tpu_custom_call.1} parent=1 // pred_fallthru
      _
    // Predicated region
    $region66: #{tpu_custom_call.1} parent=1 // pred_check
      _
    $region67: #{tpu_custom_call.1} parent=1 // pred_check_branch
      %129 = sbr.rel (0) target = $region69
    $region68: #{tpu_custom_call.1} parent=1 // pred_region
      _
    $region69: #{tpu_custom_call.1} parent=1 // pred_fallthru
      _
    // Predicated region
    $region70: #{tpu_custom_call.1} parent=1 // pred_check
      _
    $region71: #{tpu_custom_call.1} parent=1 // pred_check_branch
      %131 = sbr.rel (0) target = $region73
    $region72: #{tpu_custom_call.1} parent=1 // pred_region
      _
    $region73: #{tpu_custom_call.1} parent=1 // pred_fallthru
      _
    // Predicated region
    $region74: #{tpu_custom_call.1} parent=1 // pred_check
      _
    $region75: #{tpu_custom_call.1} parent=1 // pred_check_branch
      %133 = sbr.rel (0) target = $region77
    $region76: #{tpu_custom_call.1} parent=1 // pred_region
      _
    $region77: #{tpu_custom_call.1} parent=1 // pred_fallthru
      _
    // Predicated region
    $region78: #{tpu_custom_call.1} parent=1 // pred_check
      _
    $region79: #{tpu_custom_call.1} parent=1 // pred_check_branch
      %135 = sbr.rel (0) target = $region81
    $region80: #{tpu_custom_call.1} parent=1 // pred_region
      %137 = dma.done [#allocation3], 256
    $region81: #{tpu_custom_call.1} parent=1 // pred_fallthru
      _
    // Predicated region
    $region82: #{tpu_custom_call.1} parent=1 // pred_check
      _
    $region83: #{tpu_custom_call.1} parent=1 // pred_check_branch
      %139 = sbr.rel (0) target = $region85
    $region84: #{tpu_custom_call.1} parent=1 // pred_region
      %141 = dma.done [#allocation6], 256
    $region85: #{tpu_custom_call.1} parent=1 // pred_fallthru
      _
    // Predicated region
    $region86: #{tpu_custom_call.1} parent=1 // pred_check
      _
    $region87: #{tpu_custom_call.1} parent=1 // pred_check_branch
      %143 = sbr.rel (0) target = $region89
    $region88: #{tpu_custom_call.1} parent=1 // pred_region
      %145 = dma.done [#allocation6], 32
    $region89: #{tpu_custom_call.1} parent=1 // pred_fallthru
      _
    // Predicated region
    $region90: #{tpu_custom_call.1} parent=1 // pred_check
      _
    $region91: #{tpu_custom_call.1} parent=1 // pred_check_branch
      %147 = sbr.rel (0) target = $region93
    $region92: #{tpu_custom_call.1} parent=1 // pred_region
      %149 = dma.done [#allocation9], 16
    $region93: #{tpu_custom_call.1} parent=1 // pred_fallthru
      _
    // Predicated region
    $region94: #{tpu_custom_call.1} parent=1 // pred_check
      _
    $region95: #{tpu_custom_call.1} parent=1 // pred_check_branch
      %151 = sbr.rel (0) target = $region97
    $region96: #{tpu_custom_call.1} parent=1 // pred_region
      %153 = dma.done [#allocation9], 16
    $region97: #{tpu_custom_call.1} parent=1 // pred_fallthru
      _
    // Predicated region
    $region98: #{tpu_custom_call.1} parent=1 // pred_check
      _
    $region99: #{tpu_custom_call.1} parent=1 // pred_check_branch
      %155 = sbr.rel (0) target = $region101
    $region100: #{tpu_custom_call.1} parent=1 // pred_region
      %157 = dma.done [#allocation12], 16
    $region101: #{tpu_custom_call.1} parent=1 // pred_fallthru
      _
    // Predicated region
    $region102: #{tpu_custom_call.1} parent=1 // pred_check
      _
    $region103: #{tpu_custom_call.1} parent=1 // pred_check_branch
      %159 = sbr.rel (0) target = $region105
    $region104: #{tpu_custom_call.1} parent=1 // pred_region
      %161 = dma.done [#allocation12], 16
    $region105: #{tpu_custom_call.1} parent=1 // pred_fallthru
      _
    %v162 = vld [vmem:[#allocation2] sm:$0xff]
    %v163 = vld [vmem:[#allocation2 + $0x8] sm:$0xff]
    %v164 = vld [vmem:[#allocation5] sm:$0xff]
    %v165 = vld [vmem:[#allocation5 + $0x8] sm:$0xff]
    %v166 = vld [vmem:[#allocation8] sm:$0x1]
    %v167 = vld [vmem:[#allocation10] sm:$0x1]
    %vm168 = vcmask 523264
    %v169 = vsel %vm168, %v162, 0.0
    %170 = vadd.xlane.f32.xlu0 %v169
    %v171 = vpop.xlane.xlu0 %170
    %v172 = vsel %vm168, %v163, 0.0
    %173 = vadd.xlane.f32.xlu0 %v172
    %v174 = vpop.xlane.xlu0 %173
    %v175 = vrcp.pop 64.0
    %v176 = vmul.f32 64.0, %v175
    %v177 = vsub.f32 1.0, %v176
    %v178 = vmul.f32 %v175, %v177
    %v179 = vadd.f32 %v175, %v178
    %vm180 = vweird.f32 %v175
    %v181 = vsel %vm180, %v175, %v179
    %v182 = vmul.f32 %v171, %v181
    %v183 = vmul.f32 %v174, %v181
    %v184 = vsub.f32 %v162, %v182
    %v185 = vsub.f32 %v163, %v183
    %v186 = vmul.f32 %v184, %v184
    %v187 = vmul.f32 %v185, %v185
    %v188 = vsel %vm168, %v186, 0.0
    %189 = vadd.xlane.f32.xlu0 %v188
    %v190 = vpop.xlane.xlu0 %189
    %v191 = vsel %vm168, %v187, 0.0
    %192 = vadd.xlane.f32.xlu0 %v191
    %v193 = vpop.xlane.xlu0 %192
    %v194 = vmul.f32 %v190, %v181
    %v195 = vmul.f32 %v193, %v181
    %v196 = vadd.f32 %v194, 1e-05
    %v197 = vadd.f32 %v195, 1e-05
    %v198 = vrsqrt.pop %v196
    %v199 = vmul.f32 %v198, %v196
    %v200 = vmul.f32 %v199, %v198
    %v201 = vmul.f32 0.5, %v200
    %v202 = vsub.f32 1.5, %v201
    %v203 = vmul.f32 %v198, %v202
    %vm204 = vweird.f32 %v196
    %vm205 = vweird.f32 %v198
    %vm206 = vmor %vm204, %vm205
    %v207 = vsel %vm206, %v198, %v203
    %v208 = vrsqrt.pop %v197
    %v209 = vmul.f32 %v208, %v197
    %v210 = vmul.f32 %v209, %v208
    %v211 = vmul.f32 0.5, %v210
    %v212 = vsub.f32 1.5, %v211
    %v213 = vmul.f32 %v208, %v212
    %vm214 = vweird.f32 %v197
    %vm215 = vweird.f32 %v208
    %vm216 = vmor %vm214, %vm215
    %v217 = vsel %vm216, %v208, %v213
    %v218 = vmul.f32 %v184, %v207
    %v219 = vmul.f32 %v185, %v217
    %v221 = vperm.slane %v166, 0
    %v223 = vmul.f32 %v218, %v221
    %v224 = vmul.f32 %v219, %v221
    %v226 = vperm.slane %v167, 0
    %v228 = vadd.f32 %v223, %v226
    %v229 = vadd.f32 %v224, %v226
    %v230 = vld [vmem:[%s5] sm:$0xff]
    %v231 = vld [vmem:[%s5 + $0x8] sm:$0xff]
    %v232 = vld [vmem:[%s5 + $0x10] sm:$0xff]
    %v233 = vld [vmem:[%s5 + $0x18] sm:$0xff]
    %v234 = vld [vmem:[%s5 + $0x20] sm:$0xff]
    %v235 = vld [vmem:[%s5 + $0x28] sm:$0xff]
    %v236 = vld [vmem:[%s5 + $0x30] sm:$0xff]
    %v237 = vld [vmem:[%s5 + $0x38] sm:$0xff]
    %v238 = vld [vmem:[%s5 + $0x40] sm:$0xff]
    %v239 = vld [vmem:[%s5 + $0x48] sm:$0xff]
    %v240 = vld [vmem:[%s5 + $0x50] sm:$0xff]
    %v241 = vld [vmem:[%s5 + $0x58] sm:$0xff]
    %v242 = vld [vmem:[%s5 + $0x60] sm:$0xff]
    %v243 = vld [vmem:[%s5 + $0x68] sm:$0xff]
    %v244 = vld [vmem:[%s5 + $0x70] sm:$0xff]
    %v245 = vld [vmem:[%s5 + $0x78] sm:$0xff]
    %v246 = vld [vmem:[%s6] sm:$0x3]
    %v248 = vperm.slane %v246, 0
    %v249 = vperm.slane %v246, 1
    %v253 = vsel %vm168, %v228, 0
    %v256 = vsel %vm168, %v229, 0
    %258 = vmatpush.msra.mxu0 0.0
    %259 = vmatpush.msra.mxu0 0.0
    %260 = vmatpush.msra.mxu0 0.0
    %261 = vmatpush.msra.mxu0 0.0
    %262 = vmatpush.msra.mxu0 0.0
    %263 = vmatpush.msra.mxu0 0.0
    %264 = vmatpush.msra.mxu0 0.0
    %265 = vmatpush.msra.mxu0 0.0
    %266 = vmatpush.msra.mxu0 %v244
    %267 = vmatpush.msra.mxu0 %v242
    %268 = vmatpush.msra.mxu0 %v240
    %269 = vmatpush.msra.mxu0 %v238
    %270 = vmatpush.msra.mxu0 %v236
    %271 = vmatpush.msra.mxu0 %v234
    %272 = vmatpush.msra.mxu0 %v232
    %273 = vmatpush.msra.mxu0 %v230
    %274 = vmatmul.f32.gmra.mxu0 %v253
    %v275 = vpop.f32.mrf.mxu0
    %v276 = vadd.f32 %v248, %v275
    %277 = vmatmul.f32.gmra.mxu0 %v256
    %v278 = vpop.f32.mrf.mxu0
    %v279 = vadd.f32 %v248, %v278
    %280 = vdwg.mxu0
    %281 = vmatpush.msra.mxu0 0.0
    %282 = vmatpush.msra.mxu0 0.0
    %283 = vmatpush.msra.mxu0 0.0
    %284 = vmatpush.msra.mxu0 0.0
    %285 = vmatpush.msra.mxu0 0.0
    %286 = vmatpush.msra.mxu0 0.0
    %287 = vmatpush.msra.mxu0 0.0
    %288 = vmatpush.msra.mxu0 0.0
    %289 = vmatpush.msra.mxu0 %v245
    %290 = vmatpush.msra.mxu0 %v243
    %291 = vmatpush.msra.mxu0 %v241
    %292 = vmatpush.msra.mxu0 %v239
    %293 = vmatpush.msra.mxu0 %v237
    %294 = vmatpush.msra.mxu0 %v235
    %295 = vmatpush.msra.mxu0 %v233
    %296 = vmatpush.msra.mxu0 %v231
    %297 = vmatmul.f32.gmra.mxu0 %v253
    %v298 = vpop.f32.mrf.mxu0
    %v299 = vadd.f32 %v249, %v298
    %300 = vmatmul.f32.gmra.mxu0 %v256
    %v301 = vpop.f32.mrf.mxu0
    %v302 = vadd.f32 %v249, %v301
    %303 = vdwg.mxu0
    %306 = vrot.lane.b32.xlu0 %v276, 64
    %v307 = vpop.permute.xlu0 %306
    %308 = vrot.lane.b32.xlu0 %v279, 64
    %v309 = vpop.permute.xlu0 %308
    %vm310 = vcmask 130048
    %v311 = vsel %vm310, %v276, 0
    %v313 = vsel %vm310, %v279, 0
    %v315 = vsel %vm310, %v307, 0
    %v317 = vsel %vm310, %v309, 0
    %319 = vmatpush.xpose.msra.mxu0 0.0
    %320 = vmatpush.xpose.msra.mxu0 0.0
    %321 = vmatpush.xpose.msra.mxu0 0.0
    %322 = vmatpush.xpose.msra.mxu0 0.0
    %323 = vmatpush.xpose.msra.mxu0 0.0
    %324 = vmatpush.xpose.msra.mxu0 0.0
    %325 = vmatpush.xpose.msra.mxu0 0.0
    %326 = vmatpush.xpose.msra.mxu0 0.0
    %327 = vmatpush.xpose.msra.mxu0 0.0
    %328 = vmatpush.xpose.msra.mxu0 0.0
    %329 = vmatpush.xpose.msra.mxu0 0.0
    %330 = vmatpush.xpose.msra.mxu0 0.0
    %331 = vmatpush.xpose.msra.mxu0 0.0
    %332 = vmatpush.xpose.msra.mxu0 0.0
    %333 = vmatpush.xpose.msra.mxu0 %v317
    %334 = vmatpush.xpose.msra.mxu0 %v315
    %335 = vmatmul.f32.gmra.mxu0 %v311
    %v336 = vpop.f32.mrf.mxu0
    %v337 = vadd.f32 0.0, %v336
    %338 = vmatmul.f32.gmra.mxu0 %v313
    %v339 = vpop.f32.mrf.mxu0
    %v340 = vadd.f32 0.0, %v339
    %341 = vdwg.mxu0
    %v342 = vmul.f32 %v337, 0.25
    %v343 = vmul.f32 %v340, 0.25
    %v344 = vadd.f32 %v342, %v164
    %v345 = vadd.f32 %v343, %v165
    %v346 = vsel %vm310, %v344, -inf
    %347 = vmax.xlane.f32.xlu0 %v346
    %v348 = vpop.xlane.xlu0 %347
    %v349 = vsel %vm310, %v345, -inf
    %350 = vmax.xlane.f32.xlu0 %v349
    %v351 = vpop.xlane.xlu0 %350
    %v352 = vsub.f32 %v344, %v348
    %v353 = vsub.f32 %v345, %v351
    %v354 = vmul.f32 %v352, 1.442695
    %v355 = vpow.pop %v354
    %v356 = vmul.f32 %v353, 1.442695
    %v357 = vpow.pop %v356
    %v358 = vsel %vm310, %v355, 0.0
    %359 = vadd.xlane.f32.xlu0 %v358
    %v360 = vpop.xlane.xlu0 %359
    %v361 = vsel %vm310, %v357, 0.0
    %362 = vadd.xlane.f32.xlu0 %v361
    %v363 = vpop.xlane.xlu0 %362
    %v364 = vrcp.pop %v360
    %v365 = vrcp.pop %v363
    %v366 = vmul.f32 %v355, %v364
    %v367 = vmul.f32 %v357, %v365
    %v369 = vsel %vm310, %v366, 0
    %v372 = vsel %vm310, %v367, 0
    %374 = vmatpush.msra.mxu0 0.0
    %375 = vmatpush.msra.mxu0 0.0
    %376 = vmatpush.msra.mxu0 0.0
    %377 = vmatpush.msra.mxu0 0.0
    %378 = vmatpush.msra.mxu0 0.0
    %379 = vmatpush.msra.mxu0 0.0
    %380 = vmatpush.msra.mxu0 0.0
    %381 = vmatpush.msra.mxu0 0.0
    %382 = vmatpush.msra.mxu0 0.0
    %383 = vmatpush.msra.mxu0 0.0
    %384 = vmatpush.msra.mxu0 0.0
    %385 = vmatpush.msra.mxu0 0.0
    %386 = vmatpush.msra.mxu0 0.0
    %387 = vmatpush.msra.mxu0 0.0
    %388 = vmatpush.msra.mxu0 %v302
    %389 = vmatpush.msra.mxu0 %v299
    %390 = vmatmul.f32.gmra.mxu0 %v369
    %v391 = vpop.f32.mrf.mxu0
    %v392 = vadd.f32 0.0, %v391
    %393 = vmatmul.f32.gmra.mxu0 %v372
    %v394 = vpop.f32.mrf.mxu0
    %v395 = vadd.f32 0.0, %v394
    %396 = vdwg.mxu0
    %v397 = vld [vmem:[%s7] sm:$0xff]
    %v398 = vld [vmem:[%s7 + $0x8] sm:$0xff]
    %399 = vrot.lane.b32.xlu0 %v276, 112
    %v400 = vpop.permute.xlu0 %399
    %401 = vrot.lane.b32.xlu0 %v279, 112
    %v402 = vpop.permute.xlu0 %401
    %403 = vrot.lane.b32.xlu0 %v276, 48
    %v404 = vpop.permute.xlu0 %403
    %405 = vrot.lane.b32.xlu0 %v279, 48
    %v406 = vpop.permute.xlu0 %405
    %v407 = vsel %vm310, %v400, 0
    %v409 = vsel %vm310, %v402, 0
    %v411 = vsel %vm310, %v404, 0
    %v413 = vsel %vm310, %v406, 0
    %415 = vmatpush.xpose.msra.mxu0 0.0
    %416 = vmatpush.xpose.msra.mxu0 0.0
    %417 = vmatpush.xpose.msra.mxu0 0.0
    %418 = vmatpush.xpose.msra.mxu0 0.0
    %419 = vmatpush.xpose.msra.mxu0 0.0
    %420 = vmatpush.xpose.msra.mxu0 0.0
    %421 = vmatpush.xpose.msra.mxu0 0.0
    %422 = vmatpush.xpose.msra.mxu0 0.0
    %423 = vmatpush.xpose.msra.mxu0 0.0
    %424 = vmatpush.xpose.msra.mxu0 0.0
    %425 = vmatpush.xpose.msra.mxu0 0.0
    %426 = vmatpush.xpose.msra.mxu0 0.0
    %427 = vmatpush.xpose.msra.mxu0 0.0
    %428 = vmatpush.xpose.msra.mxu0 0.0
    %429 = vmatpush.xpose.msra.mxu0 %v413
    %430 = vmatpush.xpose.msra.mxu0 %v411
    %431 = vmatmul.f32.gmra.mxu0 %v407
    %v432 = vpop.f32.mrf.mxu0
    %v433 = vadd.f32 0.0, %v432
    %434 = vmatmul.f32.gmra.mxu0 %v409
    %v435 = vpop.f32.mrf.mxu0
    %v436 = vadd.f32 0.0, %v435
    %437 = vdwg.mxu0
    %v438 = vmul.f32 %v433, 0.25
    %v439 = vmul.f32 %v436, 0.25
    %v440 = vadd.f32 %v438, %v164
    %v441 = vadd.f32 %v439, %v165
    %v442 = vsel %vm310, %v440, -inf
    %443 = vmax.xlane.f32.xlu0 %v442
    %v444 = vpop.xlane.xlu0 %443
    %v445 = vsel %vm310, %v441, -inf
    %446 = vmax.xlane.f32.xlu0 %v445
    %v447 = vpop.xlane.xlu0 %446
    %v448 = vsub.f32 %v440, %v444
    %v449 = vsub.f32 %v441, %v447
    %v450 = vmul.f32 %v448, 1.442695
    %v451 = vpow.pop %v450
    %v452 = vmul.f32 %v449, 1.442695
    %v453 = vpow.pop %v452
    %v454 = vsel %vm310, %v451, 0.0
    %455 = vadd.xlane.f32.xlu0 %v454
    %v456 = vpop.xlane.xlu0 %455
    %v457 = vsel %vm310, %v453, 0.0
    %458 = vadd.xlane.f32.xlu0 %v457
    %v459 = vpop.xlane.xlu0 %458
    %v460 = vrcp.pop %v456
    %v461 = vrcp.pop %v459
    %v462 = vmul.f32 %v451, %v460
    %v463 = vmul.f32 %v453, %v461
    %466 = vrot.lane.b32.xlu0 %v299, 112
    %v467 = vpop.permute.xlu0 %466
    %468 = vrot.lane.b32.xlu0 %v302, 112
    %v469 = vpop.permute.xlu0 %468
    %v473 = vsel %vm310, %v462, 0
    %v476 = vsel %vm310, %v463, 0
    %478 = vmatpush.msra.mxu0 0.0
    %479 = vmatpush.msra.mxu0 0.0
    %480 = vmatpush.msra.mxu0 0.0
    %481 = vmatpush.msra.mxu0 0.0
    %482 = vmatpush.msra.mxu0 0.0
    %483 = vmatpush.msra.mxu0 0.0
    %484 = vmatpush.msra.mxu0 0.0
    %485 = vmatpush.msra.mxu0 0.0
    %486 = vmatpush.msra.mxu0 0.0
    %487 = vmatpush.msra.mxu0 0.0
    %488 = vmatpush.msra.mxu0 0.0
    %489 = vmatpush.msra.mxu0 0.0
    %490 = vmatpush.msra.mxu0 0.0
    %491 = vmatpush.msra.mxu0 0.0
    %492 = vmatpush.msra.mxu0 %v469
    %493 = vmatpush.msra.mxu0 %v467
    %494 = vmatmul.f32.gmra.mxu0 %v473
    %v495 = vpop.f32.mrf.mxu0
    %v496 = vadd.f32 0.0, %v495
    %497 = vmatmul.f32.gmra.mxu0 %v476
    %v498 = vpop.f32.mrf.mxu0
    %v499 = vadd.f32 0.0, %v498
    %500 = vdwg.mxu0
    %v501 = vld [vmem:[%s7 + $0x10] sm:$0xff]
    %v502 = vld [vmem:[%s7 + $0x18] sm:$0xff]
    %v504 = vsel %vm310, %v496, 0
    %v507 = vsel %vm310, %v499, 0
    %509 = vmatpush.msra.mxu0 0.0
    %510 = vmatpush.msra.mxu0 0.0
    %511 = vmatpush.msra.mxu0 0.0
    %512 = vmatpush.msra.mxu0 0.0
    %513 = vmatpush.msra.mxu0 0.0
    %514 = vmatpush.msra.mxu0 0.0
    %515 = vmatpush.msra.mxu0 0.0
    %516 = vmatpush.msra.mxu0 0.0
    %517 = vmatpush.msra.mxu0 0.0
    %518 = vmatpush.msra.mxu0 0.0
    %519 = vmatpush.msra.mxu0 0.0
    %520 = vmatpush.msra.mxu0 0.0
    %521 = vmatpush.msra.mxu0 0.0
    %522 = vmatpush.msra.mxu0 0.0
    %523 = vmatpush.msra.mxu0 %v502
    %524 = vmatpush.msra.mxu0 %v501
    %525 = vmatmul.f32.gmra.mxu0 %v504
    %v526 = vpop.f32.mrf.mxu0
    %v527 = vadd.f32 0.0, %v526
    %528 = vmatmul.f32.gmra.mxu0 %v507
    %v529 = vpop.f32.mrf.mxu0
    %v530 = vadd.f32 0.0, %v529
    %531 = vdwg.mxu0
    %v533 = vsel %vm310, %v392, 0
    %v536 = vsel %vm310, %v395, 0
    %538 = vmatpush.msra.mxu0 0.0
    %539 = vmatpush.msra.mxu0 0.0
    %540 = vmatpush.msra.mxu0 0.0
    %541 = vmatpush.msra.mxu0 0.0
    %542 = vmatpush.msra.mxu0 0.0
    %543 = vmatpush.msra.mxu0 0.0
    %544 = vmatpush.msra.mxu0 0.0
    %545 = vmatpush.msra.mxu0 0.0
    %546 = vmatpush.msra.mxu0 0.0
    %547 = vmatpush.msra.mxu0 0.0
    %548 = vmatpush.msra.mxu0 0.0
    %549 = vmatpush.msra.mxu0 0.0
    %550 = vmatpush.msra.mxu0 0.0
    %551 = vmatpush.msra.mxu0 0.0
    %552 = vmatpush.msra.mxu0 %v398
    %553 = vmatpush.msra.mxu0 %v397
    %554 = vmatmul.f32.gmra.mxu0 %v533
    %v555 = vpop.f32.mrf.mxu0
    %v556 = vadd.f32 %v527, %v555
    %557 = vmatmul.f32.gmra.mxu0 %v536
    %v558 = vpop.f32.mrf.mxu0
    %v559 = vadd.f32 %v530, %v558
    %560 = vdwg.mxu0
    %561 = vrot.lane.b32.xlu0 %v276, 96
    %v562 = vpop.permute.xlu0 %561
    %563 = vrot.lane.b32.xlu0 %v279, 96
    %v564 = vpop.permute.xlu0 %563
    %565 = vrot.lane.b32.xlu0 %v276, 32
    %v566 = vpop.permute.xlu0 %565
    %567 = vrot.lane.b32.xlu0 %v279, 32
    %v568 = vpop.permute.xlu0 %567
    %v569 = vsel %vm310, %v562, 0
    %v571 = vsel %vm310, %v564, 0
    %v573 = vsel %vm310, %v566, 0
    %v575 = vsel %vm310, %v568, 0
    %577 = vmatpush.xpose.msra.mxu0 0.0
    %578 = vmatpush.xpose.msra.mxu0 0.0
    %579 = vmatpush.xpose.msra.mxu0 0.0
    %580 = vmatpush.xpose.msra.mxu0 0.0
    %581 = vmatpush.xpose.msra.mxu0 0.0
    %582 = vmatpush.xpose.msra.mxu0 0.0
    %583 = vmatpush.xpose.msra.mxu0 0.0
    %584 = vmatpush.xpose.msra.mxu0 0.0
    %585 = vmatpush.xpose.msra.mxu0 0.0
    %586 = vmatpush.xpose.msra.mxu0 0.0
    %587 = vmatpush.xpose.msra.mxu0 0.0
    %588 = vmatpush.xpose.msra.mxu0 0.0
    %589 = vmatpush.xpose.msra.mxu0 0.0
    %590 = vmatpush.xpose.msra.mxu0 0.0
    %591 = vmatpush.xpose.msra.mxu0 %v575
    %592 = vmatpush.xpose.msra.mxu0 %v573
    %593 = vmatmul.f32.gmra.mxu0 %v569
    %v594 = vpop.f32.mrf.mxu0
    %v595 = vadd.f32 0.0, %v594
    %596 = vmatmul.f32.gmra.mxu0 %v571
    %v597 = vpop.f32.mrf.mxu0
    %v598 = vadd.f32 0.0, %v597
    %599 = vdwg.mxu0
    %v600 = vmul.f32 %v595, 0.25
    %v601 = vmul.f32 %v598, 0.25
    %v602 = vadd.f32 %v600, %v164
    %v603 = vadd.f32 %v601, %v165
    %v604 = vsel %vm310, %v602, -inf
    %605 = vmax.xlane.f32.xlu0 %v604
    %v606 = vpop.xlane.xlu0 %605
    %v607 = vsel %vm310, %v603, -inf
    %608 = vmax.xlane.f32.xlu0 %v607
    %v609 = vpop.xlane.xlu0 %608
    %v610 = vsub.f32 %v602, %v606
    %v611 = vsub.f32 %v603, %v609
    %v612 = vmul.f32 %v610, 1.442695
    %v613 = vpow.pop %v612
    %v614 = vmul.f32 %v611, 1.442695
    %v615 = vpow.pop %v614
    %v616 = vsel %vm310, %v613, 0.0
    %617 = vadd.xlane.f32.xlu0 %v616
    %v618 = vpop.xlane.xlu0 %617
    %v619 = vsel %vm310, %v615, 0.0
    %620 = vadd.xlane.f32.xlu0 %v619
    %v621 = vpop.xlane.xlu0 %620
    %v622 = vrcp.pop %v618
    %v623 = vrcp.pop %v621
    %v624 = vmul.f32 %v613, %v622
    %v625 = vmul.f32 %v615, %v623
    %626 = vrot.lane.b32.xlu0 %v299, 96
    %v627 = vpop.permute.xlu0 %626
    %628 = vrot.lane.b32.xlu0 %v302, 96
    %v629 = vpop.permute.xlu0 %628
    %v633 = vsel %vm310, %v624, 0
    %v636 = vsel %vm310, %v625, 0
    %638 = vmatpush.msra.mxu0 0.0
    %639 = vmatpush.msra.mxu0 0.0
    %640 = vmatpush.msra.mxu0 0.0
    %641 = vmatpush.msra.mxu0 0.0
    %642 = vmatpush.msra.mxu0 0.0
    %643 = vmatpush.msra.mxu0 0.0
    %644 = vmatpush.msra.mxu0 0.0
    %645 = vmatpush.msra.mxu0 0.0
    %646 = vmatpush.msra.mxu0 0.0
    %647 = vmatpush.msra.mxu0 0.0
    %648 = vmatpush.msra.mxu0 0.0
    %649 = vmatpush.msra.mxu0 0.0
    %650 = vmatpush.msra.mxu0 0.0
    %651 = vmatpush.msra.mxu0 0.0
    %652 = vmatpush.msra.mxu0 %v629
    %653 = vmatpush.msra.mxu0 %v627
    %654 = vmatmul.f32.gmra.mxu0 %v633
    %v655 = vpop.f32.mrf.mxu0
    %v656 = vadd.f32 0.0, %v655
    %657 = vmatmul.f32.gmra.mxu0 %v636
    %v658 = vpop.f32.mrf.mxu0
    %v659 = vadd.f32 0.0, %v658
    %660 = vdwg.mxu0
    %v661 = vld [vmem:[%s7 + $0x20] sm:$0xff]
    %v662 = vld [vmem:[%s7 + $0x28] sm:$0xff]
    %v664 = vsel %vm310, %v656, 0
    %v667 = vsel %vm310, %v659, 0
    %669 = vmatpush.msra.mxu0 0.0
    %670 = vmatpush.msra.mxu0 0.0
    %671 = vmatpush.msra.mxu0 0.0
    %672 = vmatpush.msra.mxu0 0.0
    %673 = vmatpush.msra.mxu0 0.0
    %674 = vmatpush.msra.mxu0 0.0
    %675 = vmatpush.msra.mxu0 0.0
    %676 = vmatpush.msra.mxu0 0.0
    %677 = vmatpush.msra.mxu0 0.0
    %678 = vmatpush.msra.mxu0 0.0
    %679 = vmatpush.msra.mxu0 0.0
    %680 = vmatpush.msra.mxu0 0.0
    %681 = vmatpush.msra.mxu0 0.0
    %682 = vmatpush.msra.mxu0 0.0
    %683 = vmatpush.msra.mxu0 %v662
    %684 = vmatpush.msra.mxu0 %v661
    %685 = vmatmul.f32.gmra.mxu0 %v664
    %v686 = vpop.f32.mrf.mxu0
    %v687 = vadd.f32 0.0, %v686
    %688 = vmatmul.f32.gmra.mxu0 %v667
    %v689 = vpop.f32.mrf.mxu0
    %v690 = vadd.f32 0.0, %v689
    %691 = vdwg.mxu0
    %v692 = vadd.f32 %v556, %v687
    %v693 = vadd.f32 %v559, %v690
    %694 = vrot.lane.b32.xlu0 %v276, 80
    %v695 = vpop.permute.xlu0 %694
    %696 = vrot.lane.b32.xlu0 %v279, 80
    %v697 = vpop.permute.xlu0 %696
    %698 = vrot.lane.b32.xlu0 %v276, 16
    %v699 = vpop.permute.xlu0 %698
    %700 = vrot.lane.b32.xlu0 %v279, 16
    %v701 = vpop.permute.xlu0 %700
    %v702 = vsel %vm310, %v695, 0
    %v704 = vsel %vm310, %v697, 0
    %v706 = vsel %vm310, %v699, 0
    %v708 = vsel %vm310, %v701, 0
    %710 = vmatpush.xpose.msra.mxu0 0.0
    %711 = vmatpush.xpose.msra.mxu0 0.0
    %712 = vmatpush.xpose.msra.mxu0 0.0
    %713 = vmatpush.xpose.msra.mxu0 0.0
    %714 = vmatpush.xpose.msra.mxu0 0.0
    %715 = vmatpush.xpose.msra.mxu0 0.0
    %716 = vmatpush.xpose.msra.mxu0 0.0
    %717 = vmatpush.xpose.msra.mxu0 0.0
    %718 = vmatpush.xpose.msra.mxu0 0.0
    %719 = vmatpush.xpose.msra.mxu0 0.0
    %720 = vmatpush.xpose.msra.mxu0 0.0
    %721 = vmatpush.xpose.msra.mxu0 0.0
    %722 = vmatpush.xpose.msra.mxu0 0.0
    %723 = vmatpush.xpose.msra.mxu0 0.0
    %724 = vmatpush.xpose.msra.mxu0 %v708
    %725 = vmatpush.xpose.msra.mxu0 %v706
    %726 = vmatmul.f32.gmra.mxu0 %v702
    %v727 = vpop.f32.mrf.mxu0
    %v728 = vadd.f32 0.0, %v727
    %729 = vmatmul.f32.gmra.mxu0 %v704
    %v730 = vpop.f32.mrf.mxu0
    %v731 = vadd.f32 0.0, %v730
    %732 = vdwg.mxu0
    %v733 = vmul.f32 %v728, 0.25
    %v734 = vmul.f32 %v731, 0.25
    %v735 = vadd.f32 %v733, %v164
    %v736 = vadd.f32 %v734, %v165
    %v737 = vsel %vm310, %v735, -inf
    %738 = vmax.xlane.f32.xlu0 %v737
    %v739 = vpop.xlane.xlu0 %738
    %v740 = vsel %vm310, %v736, -inf
    %741 = vmax.xlane.f32.xlu0 %v740
    %v742 = vpop.xlane.xlu0 %741
    %v743 = vsub.f32 %v735, %v739
    %v744 = vsub.f32 %v736, %v742
    %v745 = vmul.f32 %v743, 1.442695
    %v746 = vpow.pop %v745
    %v747 = vmul.f32 %v744, 1.442695
    %v748 = vpow.pop %v747
    %v749 = vsel %vm310, %v746, 0.0
    %750 = vadd.xlane.f32.xlu0 %v749
    %v751 = vpop.xlane.xlu0 %750
    %v752 = vsel %vm310, %v748, 0.0
    %753 = vadd.xlane.f32.xlu0 %v752
    %v754 = vpop.xlane.xlu0 %753
    %v755 = vrcp.pop %v751
    %v756 = vrcp.pop %v754
    %v757 = vmul.f32 %v746, %v755
    %v758 = vmul.f32 %v748, %v756
    %759 = vrot.lane.b32.xlu0 %v299, 80
    %v760 = vpop.permute.xlu0 %759
    %761 = vrot.lane.b32.xlu0 %v302, 80
    %v762 = vpop.permute.xlu0 %761
    %v766 = vsel %vm310, %v757, 0
    %v769 = vsel %vm310, %v758, 0
    %771 = vmatpush.msra.mxu0 0.0
    %772 = vmatpush.msra.mxu0 0.0
    %773 = vmatpush.msra.mxu0 0.0
    %774 = vmatpush.msra.mxu0 0.0
    %775 = vmatpush.msra.mxu0 0.0
    %776 = vmatpush.msra.mxu0 0.0
    %777 = vmatpush.msra.mxu0 0.0
    %778 = vmatpush.msra.mxu0 0.0
    %779 = vmatpush.msra.mxu0 0.0
    %780 = vmatpush.msra.mxu0 0.0
    %781 = vmatpush.msra.mxu0 0.0
    %782 = vmatpush.msra.mxu0 0.0
    %783 = vmatpush.msra.mxu0 0.0
    %784 = vmatpush.msra.mxu0 0.0
    %785 = vmatpush.msra.mxu0 %v762
    %786 = vmatpush.msra.mxu0 %v760
    %787 = vmatmul.f32.gmra.mxu0 %v766
    %v788 = vpop.f32.mrf.mxu0
    %v789 = vadd.f32 0.0, %v788
    %790 = vmatmul.f32.gmra.mxu0 %v769
    %v791 = vpop.f32.mrf.mxu0
    %v792 = vadd.f32 0.0, %v791
    %793 = vdwg.mxu0
    %v794 = vld [vmem:[%s7 + $0x30] sm:$0xff]
    %v795 = vld [vmem:[%s7 + $0x38] sm:$0xff]
    %v797 = vsel %vm310, %v789, 0
    %v800 = vsel %vm310, %v792, 0
    %802 = vmatpush.msra.mxu0 0.0
    %803 = vmatpush.msra.mxu0 0.0
    %804 = vmatpush.msra.mxu0 0.0
    %805 = vmatpush.msra.mxu0 0.0
    %806 = vmatpush.msra.mxu0 0.0
    %807 = vmatpush.msra.mxu0 0.0
    %808 = vmatpush.msra.mxu0 0.0
    %809 = vmatpush.msra.mxu0 0.0
    %810 = vmatpush.msra.mxu0 0.0
    %811 = vmatpush.msra.mxu0 0.0
    %812 = vmatpush.msra.mxu0 0.0
    %813 = vmatpush.msra.mxu0 0.0
    %814 = vmatpush.msra.mxu0 0.0
    %815 = vmatpush.msra.mxu0 0.0
    %816 = vmatpush.msra.mxu0 %v795
    %817 = vmatpush.msra.mxu0 %v794
    %818 = vmatmul.f32.gmra.mxu0 %v797
    %v819 = vpop.f32.mrf.mxu0
    %v820 = vadd.f32 0.0, %v819
    %821 = vmatmul.f32.gmra.mxu0 %v800
    %v822 = vpop.f32.mrf.mxu0
    %v823 = vadd.f32 0.0, %v822
    %824 = vdwg.mxu0
    %v825 = vadd.f32 %v692, %v820
    %v826 = vadd.f32 %v693, %v823
    %v827 = vadd.f32 %v162, %v825
    %v828 = vadd.f32 %v163, %v826
    %v829 = vld [vmem:[#allocation11] sm:$0x1]
    %v831 = vperm.slane %v829, 0
    %v833 = vadd.f32 %v827, %v831
    %v834 = vadd.f32 %v828, %v831
    %v835 = vld [vmem:[#allocation13] sm:$0x1]
    %v836 = vld [vmem:[%s10] sm:$0x1]
    %v837 = vsel %vm168, %v833, 0.0
    %838 = vadd.xlane.f32.xlu0 %v837
    %v839 = vpop.xlane.xlu0 %838
    %v840 = vsel %vm168, %v834, 0.0
    %841 = vadd.xlane.f32.xlu0 %v840
    %v842 = vpop.xlane.xlu0 %841
    %v843 = vmul.f32 %v839, %v181
    %v844 = vmul.f32 %v842, %v181
    %v845 = vsub.f32 %v833, %v843
    %v846 = vsub.f32 %v834, %v844
    %v847 = vmul.f32 %v845, %v845
    %v848 = vmul.f32 %v846, %v846
    %v849 = vsel %vm168, %v847, 0.0
    %850 = vadd.xlane.f32.xlu0 %v849
    %v851 = vpop.xlane.xlu0 %850
    %v852 = vsel %vm168, %v848, 0.0
    %853 = vadd.xlane.f32.xlu0 %v852
    %v854 = vpop.xlane.xlu0 %853
    %v855 = vmul.f32 %v851, %v181
    %v856 = vmul.f32 %v854, %v181
    %v857 = vadd.f32 %v855, 1e-05
    %v858 = vadd.f32 %v856, 1e-05
    %v859 = vrsqrt.pop %v857
    %v860 = vmul.f32 %v859, %v857
    %v861 = vmul.f32 %v860, %v859
    %v862 = vmul.f32 0.5, %v861
    %v863 = vsub.f32 1.5, %v862
    %v864 = vmul.f32 %v859, %v863
    %vm865 = vweird.f32 %v857
    %vm866 = vweird.f32 %v859
    %vm867 = vmor %vm865, %vm866
    %v868 = vsel %vm867, %v859, %v864
    %v869 = vrsqrt.pop %v858
    %v870 = vmul.f32 %v869, %v858
    %v871 = vmul.f32 %v870, %v869
    %v872 = vmul.f32 0.5, %v871
    %v873 = vsub.f32 1.5, %v872
    %v874 = vmul.f32 %v869, %v873
    %vm875 = vweird.f32 %v858
    %vm876 = vweird.f32 %v869
    %vm877 = vmor %vm875, %vm876
    %v878 = vsel %vm877, %v869, %v874
    %v879 = vmul.f32 %v845, %v868
    %v880 = vmul.f32 %v846, %v878
    %v882 = vperm.slane %v835, 0
    %v884 = vmul.f32 %v879, %v882
    %v885 = vmul.f32 %v880, %v882
    %v887 = vperm.slane %v836, 0
    %v889 = vadd.f32 %v884, %v887
    %v890 = vadd.f32 %v885, %v887
    %v891 = vld [vmem:[%s11] sm:$0xff]
    %v892 = vld [vmem:[%s11 + $0x8] sm:$0xff]
    %v893 = vld [vmem:[%s11 + $0x10] sm:$0xff]
    %v894 = vld [vmem:[%s11 + $0x18] sm:$0xff]
    %v895 = vld [vmem:[%s11 + $0x20] sm:$0xff]
    %v896 = vld [vmem:[%s11 + $0x28] sm:$0xff]
    %v897 = vld [vmem:[%s11 + $0x30] sm:$0xff]
    %v898 = vld [vmem:[%s11 + $0x38] sm:$0xff]
    %v899 = vld [vmem:[%s11 + $0x40] sm:$0xff]
    %v900 = vld [vmem:[%s11 + $0x48] sm:$0xff]
    %v901 = vld [vmem:[%s11 + $0x50] sm:$0xff]
    %v902 = vld [vmem:[%s11 + $0x58] sm:$0xff]
    %v903 = vld [vmem:[%s11 + $0x60] sm:$0xff]
    %v904 = vld [vmem:[%s11 + $0x68] sm:$0xff]
    %v905 = vld [vmem:[%s11 + $0x70] sm:$0xff]
    %v906 = vld [vmem:[%s11 + $0x78] sm:$0xff]
    %v907 = vld [vmem:[%s12] sm:$0x3]
    %v909 = vperm.slane %v907, 0
    %v910 = vperm.slane %v907, 1
    %v914 = vsel %vm168, %v889, 0
    %v917 = vsel %vm168, %v890, 0
    %919 = vmatpush.msra.mxu0 0.0
    %920 = vmatpush.msra.mxu0 0.0
    %921 = vmatpush.msra.mxu0 0.0
    %922 = vmatpush.msra.mxu0 0.0
    %923 = vmatpush.msra.mxu0 0.0
    %924 = vmatpush.msra.mxu0 0.0
    %925 = vmatpush.msra.mxu0 0.0
    %926 = vmatpush.msra.mxu0 0.0
    %927 = vmatpush.msra.mxu0 %v905
    %928 = vmatpush.msra.mxu0 %v903
    %929 = vmatpush.msra.mxu0 %v901
    %930 = vmatpush.msra.mxu0 %v899
    %931 = vmatpush.msra.mxu0 %v897
    %932 = vmatpush.msra.mxu0 %v895
    %933 = vmatpush.msra.mxu0 %v893
    %934 = vmatpush.msra.mxu0 %v891
    %935 = vmatmul.f32.gmra.mxu0 %v914
    %v936 = vpop.f32.mrf.mxu0
    %v937 = vadd.f32 %v909, %v936
    %938 = vmatmul.f32.gmra.mxu0 %v917
    %v939 = vpop.f32.mrf.mxu0
    %v940 = vadd.f32 %v909, %v939
    %941 = vdwg.mxu0
    %942 = vmatpush.msra.mxu0 0.0
    %943 = vmatpush.msra.mxu0 0.0
    %944 = vmatpush.msra.mxu0 0.0
    %945 = vmatpush.msra.mxu0 0.0
    %946 = vmatpush.msra.mxu0 0.0
    %947 = vmatpush.msra.mxu0 0.0
    %948 = vmatpush.msra.mxu0 0.0
    %949 = vmatpush.msra.mxu0 0.0
    %950 = vmatpush.msra.mxu0 %v906
    %951 = vmatpush.msra.mxu0 %v904
    %952 = vmatpush.msra.mxu0 %v902
    %953 = vmatpush.msra.mxu0 %v900
    %954 = vmatpush.msra.mxu0 %v898
    %955 = vmatpush.msra.mxu0 %v896
    %956 = vmatpush.msra.mxu0 %v894
    %957 = vmatpush.msra.mxu0 %v892
    %958 = vmatmul.f32.gmra.mxu0 %v914
    %v959 = vpop.f32.mrf.mxu0
    %v960 = vadd.f32 %v910, %v959
    %961 = vmatmul.f32.gmra.mxu0 %v917
    %v962 = vpop.f32.mrf.mxu0
    %v963 = vadd.f32 %v910, %v962
    %964 = vdwg.mxu0
    %v965 = vmul.f32 %v937, 0.5
    %v966 = vmul.f32 %v960, 0.5
    %v967 = vmul.f32 %v940, 0.5
    %v968 = vmul.f32 %v963, 0.5
    %v969 = vmul.f32 %v937, 0.044715
    %v970 = vmul.f32 %v960, 0.044715
    %v971 = vmul.f32 %v940, 0.044715
    %v972 = vmul.f32 %v963, 0.044715
    %v973 = vmul.f32 %v969, %v937
    %v974 = vmul.f32 %v970, %v960
    %v975 = vmul.f32 %v971, %v940
    %v976 = vmul.f32 %v972, %v963
    %v977 = vmul.f32 %v973, %v937
    %v978 = vmul.f32 %v974, %v960
    %v979 = vmul.f32 %v975, %v940
    %v980 = vmul.f32 %v976, %v963
    %v981 = vadd.f32 %v937, %v977
    %v982 = vadd.f32 %v960, %v978
    %v983 = vadd.f32 %v940, %v979
    %v984 = vadd.f32 %v963, %v980
    %v985 = vmul.f32 %v981, 0.7978846
    %v986 = vmul.f32 %v982, 0.7978846
    %v987 = vmul.f32 %v983, 0.7978846
    %v988 = vmul.f32 %v984, 0.7978846
    %v989 = vtanh.pop %v985
    %v990 = vtanh.pop %v986
    %v991 = vtanh.pop %v987
    %v992 = vtanh.pop %v988
    %v993 = vadd.f32 %v989, 1.0
    %v994 = vadd.f32 %v990, 1.0
    %v995 = vadd.f32 %v991, 1.0
    %v996 = vadd.f32 %v992, 1.0
    %v997 = vmul.f32 %v965, %v993
    %v998 = vmul.f32 %v966, %v994
    %v999 = vmul.f32 %v967, %v995
    %v1000 = vmul.f32 %v968, %v996
    %v1001 = vld [vmem:[%s13] sm:$0xff]
    %v1002 = vld [vmem:[%s13 + $0x8] sm:$0xff]
    %v1003 = vld [vmem:[%s13 + $0x10] sm:$0xff]
    %v1004 = vld [vmem:[%s13 + $0x18] sm:$0xff]
    %v1005 = vld [vmem:[%s13 + $0x20] sm:$0xff]
    %v1006 = vld [vmem:[%s13 + $0x28] sm:$0xff]
    %v1007 = vld [vmem:[%s13 + $0x30] sm:$0xff]
    %v1008 = vld [vmem:[%s13 + $0x38] sm:$0xff]
    %v1009 = vld [vmem:[%s13 + $0x40] sm:$0xff]
    %v1010 = vld [vmem:[%s13 + $0x48] sm:$0xff]
    %v1011 = vld [vmem:[%s13 + $0x50] sm:$0xff]
    %v1012 = vld [vmem:[%s13 + $0x58] sm:$0xff]
    %v1013 = vld [vmem:[%s13 + $0x60] sm:$0xff]
    %v1014 = vld [vmem:[%s13 + $0x68] sm:$0xff]
    %v1015 = vld [vmem:[%s13 + $0x70] sm:$0xff]
    %v1016 = vld [vmem:[%s13 + $0x78] sm:$0xff]
    %v1017 = vld [vmem:[%s13 + $0x80] sm:$0xff]
    %v1018 = vld [vmem:[%s13 + $0x88] sm:$0xff]
    %v1019 = vld [vmem:[%s13 + $0x90] sm:$0xff]
    %v1020 = vld [vmem:[%s13 + $0x98] sm:$0xff]
    %v1021 = vld [vmem:[%s13 + $0xa0] sm:$0xff]
    %v1022 = vld [vmem:[%s13 + $0xa8] sm:$0xff]
    %v1023 = vld [vmem:[%s13 + $0xb0] sm:$0xff]
    %v1024 = vld [vmem:[%s13 + $0xb8] sm:$0xff]
    %v1025 = vld [vmem:[%s13 + $0xc0] sm:$0xff]
    %v1026 = vld [vmem:[%s13 + $0xc8] sm:$0xff]
    %v1027 = vld [vmem:[%s13 + $0xd0] sm:$0xff]
    %v1028 = vld [vmem:[%s13 + $0xd8] sm:$0xff]
    %v1029 = vld [vmem:[%s13 + $0xe0] sm:$0xff]
    %v1030 = vld [vmem:[%s13 + $0xe8] sm:$0xff]
    %v1031 = vld [vmem:[%s13 + $0xf0] sm:$0xff]
    %v1032 = vld [vmem:[%s13 + $0xf8] sm:$0xff]
    %1033 = vmatpush.msra.mxu0 %v1016
    %1034 = vmatpush.msra.mxu0 %v1015
    %1035 = vmatpush.msra.mxu0 %v1014
    %1036 = vmatpush.msra.mxu0 %v1013
    %1037 = vmatpush.msra.mxu0 %v1012
    %1038 = vmatpush.msra.mxu0 %v1011
    %1039 = vmatpush.msra.mxu0 %v1010
    %1040 = vmatpush.msra.mxu0 %v1009
    %1041 = vmatpush.msra.mxu0 %v1008
    %1042 = vmatpush.msra.mxu0 %v1007
    %1043 = vmatpush.msra.mxu0 %v1006
    %1044 = vmatpush.msra.mxu0 %v1005
    %1045 = vmatpush.msra.mxu0 %v1004
    %1046 = vmatpush.msra.mxu0 %v1003
    %1047 = vmatpush.msra.mxu0 %v1002
    %1048 = vmatpush.msra.mxu0 %v1001
    %1049 = vmatmul.f32.gmra.mxu0 %v997
    %v1050 = vpop.f32.mrf.mxu0
    %v1051 = vadd.f32 0.0, %v1050
    %1052 = vmatmul.f32.gmra.mxu0 %v999
    %v1053 = vpop.f32.mrf.mxu0
    %v1054 = vadd.f32 0.0, %v1053
    %1055 = vdwg.mxu0
    %1056 = vmatpush.msra.mxu0 %v1032
    %1057 = vmatpush.msra.mxu0 %v1031
    %1058 = vmatpush.msra.mxu0 %v1030
    %1059 = vmatpush.msra.mxu0 %v1029
    %1060 = vmatpush.msra.mxu0 %v1028
    %1061 = vmatpush.msra.mxu0 %v1027
    %1062 = vmatpush.msra.mxu0 %v1026
    %1063 = vmatpush.msra.mxu0 %v1025
    %1064 = vmatpush.msra.mxu0 %v1024
    %1065 = vmatpush.msra.mxu0 %v1023
    %1066 = vmatpush.msra.mxu0 %v1022
    %1067 = vmatpush.msra.mxu0 %v1021
    %1068 = vmatpush.msra.mxu0 %v1020
    %1069 = vmatpush.msra.mxu0 %v1019
    %1070 = vmatpush.msra.mxu0 %v1018
    %1071 = vmatpush.msra.mxu0 %v1017
    %1072 = vmatmul.f32.gmra.mxu0 %v998
    %v1073 = vpop.f32.mrf.mxu0
    %v1074 = vadd.f32 %v1051, %v1073
    %1075 = vmatmul.f32.gmra.mxu0 %v1000
    %v1076 = vpop.f32.mrf.mxu0
    %v1077 = vadd.f32 %v1054, %v1076
    %1078 = vdwg.mxu0
    %v1079 = vadd.f32 %v833, %v1074
    %v1080 = vadd.f32 %v834, %v1077
    %v1081 = vld [vmem:[%s14] sm:$0x1]
    %v1083 = vperm.slane %v1081, 0
    %v1085 = vadd.f32 %v1079, %v1083
    %v1086 = vadd.f32 %v1080, %v1083
    %v1087 = vld [vmem:[%s15] sm:$0x1]
    %v1088 = vld [vmem:[%s16] sm:$0x1]
    %v1089 = vsel %vm168, %v1085, 0.0
    %1090 = vadd.xlane.f32.xlu0 %v1089
    %v1091 = vpop.xlane.xlu0 %1090
    %v1092 = vsel %vm168, %v1086, 0.0
    %1093 = vadd.xlane.f32.xlu0 %v1092
    %v1094 = vpop.xlane.xlu0 %1093
    %v1095 = vmul.f32 %v1091, %v181
    %v1096 = vmul.f32 %v1094, %v181
    %v1097 = vsub.f32 %v1085, %v1095
    %v1098 = vsub.f32 %v1086, %v1096
    %v1099 = vmul.f32 %v1097, %v1097
    %v1100 = vmul.f32 %v1098, %v1098
    %v1101 = vsel %vm168, %v1099, 0.0
    %1102 = vadd.xlane.f32.xlu0 %v1101
    %v1103 = vpop.xlane.xlu0 %1102
    %v1104 = vsel %vm168, %v1100, 0.0
    %1105 = vadd.xlane.f32.xlu0 %v1104
    %v1106 = vpop.xlane.xlu0 %1105
    %v1107 = vmul.f32 %v1103, %v181
    %v1108 = vmul.f32 %v1106, %v181
    %v1109 = vadd.f32 %v1107, 1e-05
    %v1110 = vadd.f32 %v1108, 1e-05
    %v1111 = vrsqrt.pop %v1109
    %v1112 = vmul.f32 %v1111, %v1109
    %v1113 = vmul.f32 %v1112, %v1111
    %v1114 = vmul.f32 0.5, %v1113
    %v1115 = vsub.f32 1.5, %v1114
    %v1116 = vmul.f32 %v1111, %v1115
    %vm1117 = vweird.f32 %v1109
    %vm1118 = vweird.f32 %v1111
    %vm1119 = vmor %vm1117, %vm1118
    %v1120 = vsel %vm1119, %v1111, %v1116
    %v1121 = vrsqrt.pop %v1110
    %v1122 = vmul.f32 %v1121, %v1110
    %v1123 = vmul.f32 %v1122, %v1121
    %v1124 = vmul.f32 0.5, %v1123
    %v1125 = vsub.f32 1.5, %v1124
    %v1126 = vmul.f32 %v1121, %v1125
    %vm1127 = vweird.f32 %v1110
    %vm1128 = vweird.f32 %v1121
    %vm1129 = vmor %vm1127, %vm1128
    %v1130 = vsel %vm1129, %v1121, %v1126
    %v1131 = vmul.f32 %v1097, %v1120
    %v1132 = vmul.f32 %v1098, %v1130
    %v1134 = vperm.slane %v1087, 0
    %v1136 = vmul.f32 %v1131, %v1134
    %v1137 = vmul.f32 %v1132, %v1134
    %v1139 = vperm.slane %v1088, 0
    %v1141 = vadd.f32 %v1136, %v1139
    %v1142 = vadd.f32 %v1137, %v1139
    %v1143 = vld [vmem:[#allocation7] sm:$0x3]
    %v1145 = vsel %vm310, %v1143, 0
    %1147 = vmatpush.msra.mxu0 0.0
    %1148 = vmatpush.msra.mxu0 0.0
    %1149 = vmatpush.msra.mxu0 0.0
    %1150 = vmatpush.msra.mxu0 0.0
    %1151 = vmatpush.msra.mxu0 0.0
    %1152 = vmatpush.msra.mxu0 0.0
    %1153 = vmatpush.msra.mxu0 0.0
    %1154 = vmatpush.msra.mxu0 0.0
    %1155 = vmatpush.msra.mxu0 0.0
    %1156 = vmatpush.msra.mxu0 0.0
    %1157 = vmatpush.msra.mxu0 0.0
    %1158 = vmatpush.msra.mxu0 0.0
    %1159 = vmatpush.msra.mxu0 0.0
    %1160 = vmatpush.msra.mxu0 0.0
    %1161 = vmatpush.msra.mxu0 %v1142
    %1162 = vmatpush.msra.mxu0 %v1141
    %1163 = vmatmul.f32.gmra.mxu0 %v1145
    %v1164 = vpop.f32.mrf.mxu0
    %v1165 = vadd.f32 0.0, %v1164
    %1166 = vdwg.mxu0
    %v1167 = vld [vmem:[%s17] sm:$0xff]
    %v1168 = vld [vmem:[%s17 + $0x8] sm:$0xff]
    %v1169 = vld [vmem:[%s17 + $0x10] sm:$0xff]
    %v1170 = vld [vmem:[%s17 + $0x18] sm:$0xff]
    %v1171 = vld [vmem:[%s17 + $0x20] sm:$0xff]
    %v1172 = vld [vmem:[%s17 + $0x28] sm:$0xff]
    %v1173 = vld [vmem:[%s17 + $0x30] sm:$0xff]
    %v1174 = vld [vmem:[%s17 + $0x38] sm:$0xff]
    %v1175 = vld [vmem:[%s18] sm:$0x1]
    %v1177 = vperm.slane %v1175, 0
    %v1180 = vsel %vm168, %v1165, 0
    %1182 = vmatpush.msra.mxu0 0.0
    %1183 = vmatpush.msra.mxu0 0.0
    %1184 = vmatpush.msra.mxu0 0.0
    %1185 = vmatpush.msra.mxu0 0.0
    %1186 = vmatpush.msra.mxu0 0.0
    %1187 = vmatpush.msra.mxu0 0.0
    %1188 = vmatpush.msra.mxu0 0.0
    %1189 = vmatpush.msra.mxu0 0.0
    %1190 = vmatpush.msra.mxu0 %v1174
    %1191 = vmatpush.msra.mxu0 %v1173
    %1192 = vmatpush.msra.mxu0 %v1172
    %1193 = vmatpush.msra.mxu0 %v1171
    %1194 = vmatpush.msra.mxu0 %v1170
    %1195 = vmatpush.msra.mxu0 %v1169
    %1196 = vmatpush.msra.mxu0 %v1168
    %1197 = vmatpush.msra.mxu0 %v1167
    %1198 = vmatmul.f32.gmra.mxu0 %v1180
    %v1199 = vpop.f32.mrf.mxu0
    %v1200 = vadd.f32 %v1177, %v1199
    %1201 = vdwg.mxu0
    %1202 = vst [vmem:[#allocation14] sm:$0x3] %v1200
    // Predicated region
    $region106: #{tpu_custom_call.1} parent=1 // pred_check
      _
    $region107: #{tpu_custom_call.1} parent=1 // pred_check_branch
      %1204 = sbr.rel (0) target = $region109
    $region108: #{tpu_custom_call.1} parent=1 // pred_region
      %1206 = vsyncadd [#allocation4], 0
      %s1208 = sshll.u32 [#allocation14], 4
      %s1209 = int_to_ptr.vmem [resolvable:$true] %s1208
      %s1210 = sshll.u32 %s19, 4
      %s1211 = int_to_ptr.hbm [resolvable:$true] %s1210
      %1213 = dma.vmem_to_hbm [thread:$0]  %s1209, 32, %s1211, [#allocation4]
    $region109: #{tpu_custom_call.1} parent=1 // pred_fallthru
      _
    // Predicated region
    $region110: #{tpu_custom_call.1} parent=1 // pred_check
      _
    $region111: #{tpu_custom_call.1} parent=1 // pred_check_branch
      %1215 = sbr.rel (0) target = $region113
    $region112: #{tpu_custom_call.1} parent=1 // pred_region
      %1217 = dma.done [#allocation4], 32
    $region113: #{tpu_custom_call.1} parent=1 // pred_fallthru
      _
    %1218 = vsyncpa [#allocation3], 1
    %1219 = vsyncpa [#allocation6], 1
    %1220 = vsyncpa [#allocation9], 1
    %1221 = vsyncpa [#allocation12], 1
    %1222 = vsyncpa [#allocation4], 1

</llo_original>
